<compile_context>
chip_gen: v7x
topology: tpu7x:2x2x1
jax: 0.10.0
libtpu: 0.0.40
codegen_flags: <defaults>
</compile_context>

<pallas_src>
import jax
import jax.numpy as jnp
from jax import lax
from jax.experimental import pallas as pl
from jax.experimental.pallas import tpu as pltpu

_EPS_IOU = 1e-9       # eps used in IoU denominators (torch_utils.cal_iou / cal_m_iou)
_EPS_INSIDE = 1e-9    # eps used in select_candidates_in_gts
_LANE = 128
_ROW_SUB = 16         # gt-row sub-tile; multiple of 16 keeps bf16 stores tile-aligned
_LANE_SUB = 256       # lane sub-tile (2 vregs wide) keeps temporaries vreg-resident
_PAD_COORD = -1.0e6   # dummy-anchor coordinate: dist2 ~ 2e12 >> any real distance
_APPROX_RECIP = True  # EUP vrcp for IoU denominators; set False for bit parity


def _round_up(x, m):
    return ((x + m - 1) // m) * m


def _pick_anchor_tile(na_base, bs, max_tile=2048):
    """Anchor tile: multiple of 128, as large as possible for DMA efficiency,
    but (a) total padding waste <= ~12.5% and (b) >= 4 grid steps so both v7x
    TensorCores get work (harmless on v5e/v6e)."""
    waste_cap = max(na_base // 8, _LANE)
    t = max_tile
    while t > _LANE:
        padded = _round_up(na_base, t)
        if padded - na_base <= waste_cap and bs * (padded // t) >= 4:
            return t
        t //= 2
    return _LANE


def _pad_levels(x, axis, counts, padded_counts, pad_value):
    """Pad each per-level chunk of `x` along `axis` to its padded count."""
    pieces, start = [], 0
    for n, npad in zip(counts, padded_counts):
        chunk = lax.slice_in_dim(x, start, start + n, axis=axis)
        if npad > n:
            widths = [(0, 0)] * x.ndim
            widths[axis] = (0, npad - n)
            chunk = jnp.pad(chunk, widths, constant_values=pad_value)
        pieces.append(chunk)
        start += n
    return jnp.concatenate(pieces, axis=axis)


# --------------------------------------------------------------------------
# Pallas hot path: all O(n_max_boxes * n_anchors) pairwise quantities.
# --------------------------------------------------------------------------
def _pairwise_kernel(gt_ref, mask_ref, anc_ref, pred_ref,
                     ov_ref, dist2_ref, ingts_ref, piou_ref):
    nm_pad = gt_ref.shape[1]
    na_tile = anc_ref.shape[1]
    lane_sub = min(_LANE_SUB, na_tile)
    n_col = na_tile // lane_sub
    n_row = nm_pad // _ROW_SUB

    def col_body(ci, carry_c):
        c0 = pl.multiple_of(ci * lane_sub, lane_sub)
        cs = pl.ds(c0, lane_sub)
        # Anchor / prediction lane vectors, hoisted out of the row loop.
        ax1 = anc_ref[0:1, cs]; ay1 = anc_ref[1:2, cs]
        ax2 = anc_ref[2:3, cs]; ay2 = anc_ref[3:4, cs]
        acx = (ax1 + ax2) * 0.5
        acy = (ay1 + ay2) * 0.5
        area_a = (ax2 - ax1) * (ay2 - ay1)
        px1 = pred_ref[0, 0:1, cs]; py1 = pred_ref[0, 1:2, cs]
        px2 = pred_ref[0, 2:3, cs]; py2 = pred_ref[0, 3:4, cs]
        area_p = (px2 - px1) * (py2 - py1)

        def row_body(ri, carry_r):
            r0 = pl.multiple_of(ri * _ROW_SUB, _ROW_SUB)
            rs = pl.ds(r0, _ROW_SUB)
            gt = gt_ref[0, rs, :]                      # (_ROW_SUB, 4)
            mk = mask_ref[0, rs, :]                    # (_ROW_SUB, 1)  0/1 valid-gt
            gx1 = gt[:, 0:1]; gy1 = gt[:, 1:2]
            gx2 = gt[:, 2:3]; gy2 = gt[:, 3:4]
            area_g_eps = (gx2 - gx1) * (gy2 - gy1) + _EPS_IOU   # shared denominator term

            # --- pairwise IoU(gt, anchor boxes) ---
            iw = jnp.maximum(jnp.minimum(gx2, ax2) - jnp.maximum(gx1, ax1), 0.0)
            ih = jnp.maximum(jnp.minimum(gy2, ay2) - jnp.maximum(gy1, ay1), 0.0)
            inter = iw * ih
            ov_ref[0, rs, cs] = inter * pl.reciprocal(
                area_g_eps + area_a - inter, approx=_APPROX_RECIP)

            # --- squared center-to-center distance (same top-k order as sqrt) ---
            gcx = (gx1 + gx2) * 0.5
            gcy = (gy1 + gy2) * 0.5
            dx = gcx - acx
            dy = gcy - acy
            dist2_ref[0, rs, cs] = dx * dx + dy * dy

            # --- anchor-center-inside-gt mask with valid-gt mask folded in ---
            d_min = jnp.minimum(jnp.minimum(acx - gx1, acy - gy1),
                                jnp.minimum(gx2 - acx, gy2 - acy))
            inside = jnp.where(d_min > _EPS_INSIDE, mk, 0.0)
            ingts_ref[0, rs, cs] = inside.astype(jnp.bfloat16)

            # --- pairwise IoU(gt, predicted boxes) (bf16: only scales scores) ---
            pw = jnp.maximum(jnp.minimum(gx2, px2) - jnp.maximum(gx1, px1), 0.0)
            ph = jnp.maximum(jnp.minimum(gy2, py2) - jnp.maximum(gy1, py1), 0.0)
            pinter = pw * ph
            piou_ref[0, rs, cs] = (pinter * pl.reciprocal(
                area_g_eps + area_p - pinter, approx=_APPROX_RECIP)
                                   ).astype(jnp.bfloat16)
            return carry_r

        lax.fori_loop(0, n_row, row_body, 0)
        return carry_c

    lax.fori_loop(0, n_col, col_body, 0)


def pairwise_geometry(gt_boxes, mask_gt, anchors_t, pred_t, na_tile):
    """Returns (overlaps f32, dist2 f32, inside_gt*mask bf16, pred_iou bf16),
    each [bs, nm_pad, na_pad].  anchors_t: (4, na_pad); pred_t: (bs, 4, na_pad)."""
    bs, nm_pad, _ = gt_boxes.shape
    na_pad = anchors_t.shape[1]
    n_tiles = na_pad // na_tile

    out_shape = (
        jax.ShapeDtypeStruct((bs, nm_pad, na_pad), jnp.float32),    # IoU(gt, anchors)
        jax.ShapeDtypeStruct((bs, nm_pad, na_pad), jnp.float32),    # center dist^2
        jax.ShapeDtypeStruct((bs, nm_pad, na_pad), jnp.bfloat16),   # inside-gt * mask_gt
        jax.ShapeDtypeStruct((bs, nm_pad, na_pad), jnp.bfloat16),   # IoU(gt, predictions)
    )
    out_spec = pl.BlockSpec((1, nm_pad, na_tile), lambda b, j: (b, 0, j))

    # Double-buffered in/out blocks + headroom for Mosaic internal scratch,
    # capped at 48 MiB (v7x has 64 MiB VMEM per TensorCore).
    block_bytes = (nm_pad * 4 * 4 + nm_pad * 4            # gt + mask blocks
                   + 2 * (4 * na_tile * 4)                 # anchors + pred blocks
                   + nm_pad * na_tile * (4 + 4 + 2 + 2))   # 4 output blocks
    vmem_limit = int(min(48 * 2**20, max(24 * 2**20, 2 * block_bytes + 8 * 2**20)))

    return pl.pallas_call(
        _pairwise_kernel,
        out_shape=out_shape,
        grid=(bs, n_tiles),
        in_specs=[
            pl.BlockSpec((1, nm_pad, 4), lambda b, j: (b, 0, 0)),        # gt boxes
            pl.BlockSpec((1, nm_pad, 1), lambda b, j: (b, 0, 0)),        # valid-gt mask
            pl.BlockSpec((4, na_tile), lambda b, j: (0, j)),             # anchors (coord-major)
            pl.BlockSpec((1, 4, na_tile), lambda b, j: (b, 0, j)),       # predictions (coord-major)
        ],
        out_specs=[out_spec, out_spec, out_spec, out_spec],
        compiler_params=pltpu.CompilerParams(
            dimension_semantics=("parallel", "parallel"),
            vmem_limit_bytes=vmem_limit),
    )(gt_boxes.astype(jnp.float32), mask_gt.astype(jnp.float32), anchors_t, pred_t)


# --------------------------------------------------------------------------
# JAX epilogue (top-k / scatter / gather / argmax bookkeeping).
# --------------------------------------------------------------------------
def _select_top_k_candidates(dist2, padded_counts, orig_counts, mask_gt, top_k):
    bs, nm, _ = dist2.shape
    mask_bool = mask_gt.astype(bool)                          # (bs, nm, 1)
    row_ix = jnp.arange(bs * nm, dtype=jnp.int32)[:, None]
    is_in_list, idx_list = [], []
    start = 0
    for npad, n in zip(padded_counts, orig_counts):
        lvl = lax.slice_in_dim(dist2, start, start + npad, axis=2)   # 128-aligned slice
        k = min(top_k, n)                  # padded anchors (dist2 ~ 2e12) never selected
        _, topk_idx = lax.top_k(-lvl, k)   # k smallest distances
        idx_list.append(topk_idx + start)
        # Reference semantics: masked gts force all indices to 0, then duplicates
        # (count > 1) are zeroed.  Scatter-add of ones reproduces this exactly
        # without the (bs, nm, k, npad) one-hot intermediate.
        topk_idx_m = jnp.where(mask_bool, topk_idx, 0).reshape(bs * nm, k)
        counts = jnp.zeros((bs * nm, npad), jnp.int32).at[row_ix, topk_idx_m].add(1)
        is_in_list.append((counts == 1).astype(dist2.dtype).reshape(bs, nm, npad))
        start += npad
    return jnp.concatenate(is_in_list, axis=-1), jnp.concatenate(idx_list, axis=-1)


def _threshold_calculator(is_in_candidate, candidate_idx, overlaps):
    bs, nm, na = overlaps.shape
    iou_candidates = jnp.where(is_in_candidate > 0, overlaps, jnp.zeros_like(overlaps))
    cand_idx = candidate_idx.reshape(bs * nm, -1)
    assist = (na * jnp.arange(bs * nm, dtype=cand_idx.dtype))[:, None]
    flat_idx = (cand_idx + assist).reshape(-1)
    cand_ov = jnp.take(iou_candidates.reshape(-1), flat_idx).reshape(bs, nm, -1)
    mean = jnp.mean(cand_ov, axis=-1, keepdims=True)
    std = jnp.std(cand_ov, axis=-1, ddof=1, keepdims=True)   # torch.std is unbiased
    return mean + std, iou_candidates


def _select_highest_overlaps(mask_pos, overlaps, n_max_boxes):
    fg_mask = mask_pos.sum(axis=-2)                                    # [bs, na]
    mask_multi = jnp.broadcast_to((fg_mask[:, None, :] > 1), mask_pos.shape)
    max_ov_idx = jnp.argmax(overlaps, axis=1)                          # [bs, na]
    is_max = jax.nn.one_hot(max_ov_idx, n_max_boxes, dtype=overlaps.dtype)
    is_max = jnp.transpose(is_max, (0, 2, 1))                          # [bs, nm, na]
    mask_pos = jnp.where(mask_multi, is_max, mask_pos)
    fg_mask = mask_pos.sum(axis=-2)
    target_gt_idx = jnp.argmax(mask_pos, axis=-2)                      # [bs, na]
    return target_gt_idx, fg_mask, mask_pos


def make_at_assigner(num_anchors_list, num_classes, top_k=9):
    num_anchors_list = tuple(int(n) for n in num_anchors_list)
    na = sum(num_anchors_list)
    bg_idx = num_classes

    def forward(anchors_xx_yy, ground_true_labels, ground_true_xx_yy,
                mask_ground_true, predict_xy_xy):
        bs, nm, _ = ground_true_xx_yy.shape

        if nm == 0:   # static-shape early exit (matches the torch n_max_boxes==0 branch)
            return (jnp.full((bs, na), bg_idx, jnp.int32),
                    jnp.zeros((bs, na, 4), jnp.float32),
                    jnp.zeros((bs, na, num_classes), jnp.float32),
                    jnp.zeros((bs, na), jnp.bool_))

        # --- pad the gt axis to a multiple of the in-kernel row sub-tile (inert rows) ---
        nm_pad = _round_up(nm, _ROW_SUB)
        gt_boxes = ground_true_xx_yy.astype(jnp.float32)
        gt_labels = ground_true_labels
        mask_gt = mask_ground_true.astype(jnp.float32)
        if nm_pad > nm:
            pad = ((0, 0), (0, nm_pad - nm), (0, 0))
            gt_boxes = jnp.pad(gt_boxes, pad)
            gt_labels = jnp.pad(gt_labels, pad)
            mask_gt = jnp.pad(mask_gt, pad)

        # --- anchor padding layout: per-level 128-aligned, total rounded to tile ---
        base_counts = [_round_up(n, _LANE) for n in num_anchors_list]
        na_base = sum(base_counts)
        na_tile = _pick_anchor_tile(na_base, bs)
        na_pad = _round_up(na_base, na_tile)
        padded_counts = list(base_counts)
        padded_counts[-1] += na_pad - na_base          # trailing pad lives in the last level

        anchors_p = _pad_levels(anchors_xx_yy.astype(jnp.float32), 0,
                                num_anchors_list, padded_counts, _PAD_COORD)    # [na_pad,4]
        pred_p = _pad_levels(predict_xy_xy.astype(jnp.float32), 1,
                             num_anchors_list, padded_counts, 0.0)              # [bs,na_pad,4]
        anc_t = anchors_p.T                                                     # (4, na_pad)
        # TODO(synk): emit predictions coord-major upstream (decoder layout) to skip this transpose.
        pred_t = jnp.transpose(pred_p, (0, 2, 1))                               # (bs,4,na_pad)

        # Static map: original anchor order -> slot in the padded layout.
        pieces, pstart = [], 0
        for n_lvl, npad in zip(num_anchors_list, padded_counts):
            pieces.append(jnp.arange(n_lvl, dtype=jnp.int32) + pstart)
            pstart += npad
        orig_to_pad = jnp.concatenate(pieces)                                    # [na]

        # --- Pallas hot path ---
        overlaps, dist2, is_in_gts_m, pred_iou = pairwise_geometry(
            gt_boxes, mask_gt, anc_t, pred_t, na_tile)

        # --- per-level top-k candidate selection (padded anchors have dist2 ~ 2e12,
        #     k <= real anchors per level, so no extra masking pass is needed) ---
        is_in_candidate, candidate_idx = _select_top_k_candidates(
            dist2, padded_counts, num_anchors_list, mask_gt, top_k)

        # --- adaptive threshold (mean + unbiased std of candidate IoUs) ---
        thr, iou_candidates = _threshold_calculator(is_in_candidate, candidate_idx, overlaps)
        is_pos = jnp.where(iou_candidates > thr, is_in_candidate,
                           jnp.zeros_like(is_in_candidate))

        # mask_ground_true is already folded into is_in_gts_m inside the kernel.
        mask_pos = is_pos * is_in_gts_m.astype(is_pos.dtype)
        target_gt_idx, fg_mask, mask_pos = _select_highest_overlaps(
            mask_pos, overlaps, nm_pad)

        # --- gather targets (still in padded anchor space) ---
        batch_off = (jnp.arange(bs, dtype=jnp.int32) * nm_pad)[:, None]
        tgi = target_gt_idx.astype(jnp.int32) + batch_off
        flat_labels = gt_labels.reshape(-1)
        target_labels = flat_labels[tgi.reshape(-1)].reshape(bs, na_pad)
        target_labels = jnp.where(fg_mask > 0, target_labels,
                                  jnp.full_like(target_labels, bg_idx))
        target_xy_xy = gt_boxes.reshape(-1, 4)[tgi.reshape(-1)].reshape(bs, na_pad, 4)
        target_scores = jax.nn.one_hot(target_labels, num_classes + 1,
                                       dtype=jnp.float32)[:, :, :num_classes]

        # --- score scaling by predicted IoU ---
        predict_iou = pred_iou.astype(jnp.float32) * mask_pos
        iou_max = jnp.max(predict_iou, axis=-2)[..., None]
        target_scores = target_scores * iou_max

        # --- drop padded anchors: back to the original anchor order ---
        target_labels = jnp.take(target_labels, orig_to_pad, axis=1)
        target_xy_xy = jnp.take(target_xy_xy, orig_to_pad, axis=1)
        target_scores = jnp.take(target_scores, orig_to_pad, axis=1)
        fg_mask = jnp.take(fg_mask, orig_to_pad, axis=1)

        return (target_labels.astype(jnp.int32), target_xy_xy,
                target_scores, fg_mask > 0)

    return jax.jit(forward)


def build_anchors(levels):
    """levels: list of (h, w, stride). Anchor box = cell center ± 2.5*stride."""
    boxes = []
    for h, w, s in levels:
        ys = (jnp.arange(h, dtype=jnp.float32) + 0.5) * s
        xs = (jnp.arange(w, dtype=jnp.float32) + 0.5) * s
        cy, cx = jnp.meshgrid(ys, xs, indexing="ij")
        half = 2.5 * s
        boxes.append(jnp.stack([cx - half, cy - half, cx + half, cy + half],
                               axis=-1).reshape(-1, 4))
    return jnp.concatenate(boxes, axis=0)


if __name__ == "__main__":
    num_classes = 4
    top_k = 9
    bs, n_max_boxes = 2, 8
    levels = [(16, 16, 4), (8, 8, 8), (4, 4, 16)]        # 64x64 "image", 3 FPN levels
    num_anchors_list = [h * w for h, w, _ in levels]     # [256, 64, 16] -> 336 anchors
    n_anchors = sum(num_anchors_list)

    anchors = build_anchors(levels)                      # [336, 4]

    key = jax.random.PRNGKey(0)
    k1, k2, k3, k4, k5 = jax.random.split(key, 5)
    gt_xy = jax.random.uniform(k1, (bs, n_max_boxes, 2), minval=4.0, maxval=40.0)
    gt_wh = jax.random.uniform(k2, (bs, n_max_boxes, 2), minval=8.0, maxval=24.0)
    gt_boxes = jnp.concatenate([gt_xy, gt_xy + gt_wh], axis=-1)          # [2, 8, 4]
    gt_labels = jax.random.randint(k5, (bs, n_max_boxes, 1), 0, num_classes)

    n_valid = jnp.array([5, 3])
    mask_gt = (jnp.arange(n_max_boxes)[None, :] < n_valid[:, None]
               ).astype(jnp.float32)[..., None]                          # [2, 8, 1]

    pd_xy = jax.random.uniform(k3, (bs, n_anchors, 2), minval=0.0, maxval=48.0)
    pd_wh = jax.random.uniform(k4, (bs, n_anchors, 2), minval=4.0, maxval=16.0)
    pred_boxes = jnp.concatenate([pd_xy, pd_xy + pd_wh], axis=-1)        # [2, 336, 4]

    assigner = make_at_assigner(num_anchors_list, num_classes, top_k)
    target_labels, target_xyxy, target_scores, fg_mask = assigner(
        anchors, gt_labels, gt_boxes, mask_gt, pred_boxes)
    jax.block_until_ready((target_labels, target_xyxy, target_scores, fg_mask))

    assert target_labels.shape == (bs, n_anchors)
    assert target_xyxy.shape == (bs, n_anchors, 4)
    assert target_scores.shape == (bs, n_anchors, num_classes)
    assert fg_mask.shape == (bs, n_anchors) and fg_mask.dtype == jnp.bool_
    print("KERNEL_OK")
</pallas_src>

<mosaic_0001>
module attributes {stable_mosaic.version = 11 : i64} {
  func.func private @main(%arg0: i32) attributes {dimension_semantics = [#tpu.dimension_semantics<core_parallel>], iteration_bounds = array<i64: 2>, tpu.core_type = #tpu.core_type<sc_scalar_subcore>, window_params = []} {
    return
  }
}

module attributes {stable_mosaic.version = 11 : i64} {
  func.func private @main(%arg0: i32) attributes {dimension_semantics = [#tpu.dimension_semantics<core_parallel>], iteration_bounds = array<i64: 2>, tpu.core_type = #tpu.core_type<sc_scalar_subcore>, window_params = []} {
    return
  }
}

module attributes {stable_mosaic.version = 11 : i64} {
  func.func @_pairwise_kernel(%arg0: i32, %arg1: i32, %arg2: memref<1x16x4xf32, #tpu.memory_space<vmem>>, %arg3: memref<1x16x1xf32, #tpu.memory_space<vmem>>, %arg4: memref<4x256xf32, #tpu.memory_space<vmem>>, %arg5: memref<1x4x256xf32, #tpu.memory_space<vmem>>, %arg6: memref<1x16x256xf32, #tpu.memory_space<vmem>>, %arg7: memref<1x16x256xf32, #tpu.memory_space<vmem>>, %arg8: memref<1x16x256xbf16, #tpu.memory_space<vmem>>, %arg9: memref<1x16x256xbf16, #tpu.memory_space<vmem>>) attributes {dimension_semantics = [#tpu.dimension_semantics<parallel>, #tpu.dimension_semantics<parallel>], iteration_bounds = array<i64: 2, 2>, scalar_prefetch = 0 : i64, scratch_operands = 0 : i64, tpu.core_type = #tpu.core_type<tc>, window_params = [{transform_indices = @transform_0, window_bounds = array<i64: 1, 16, 4>}, {transform_indices = @transform_1, window_bounds = array<i64: 1, 16, 1>}, {transform_indices = @transform_2, window_bounds = array<i64: 4, 256>}, {transform_indices = @transform_3, window_bounds = array<i64: 1, 4, 256>}, {transform_indices = @transform_4, window_bounds = array<i64: 1, 16, 256>}, {transform_indices = @transform_5, window_bounds = array<i64: 1, 16, 256>}, {transform_indices = @transform_6, window_bounds = array<i64: 1, 16, 256>}, {transform_indices = @transform_7, window_bounds = array<i64: 1, 16, 256>}]} {
    %c0_i32 = arith.constant 0 : i32
    %c256_i32 = arith.constant 256 : i32
    %0 = arith.muli %c0_i32, %c256_i32 : i32
    %1 = tpu.assume_multiple %0, 256 : i32
    %c0 = arith.constant 0 : index
    %2 = arith.index_cast %1 : i32 to index
    %3 = vector.load %arg4[%c0, %2] : memref<4x256xf32, #tpu.memory_space<vmem>>, vector<1x256xf32>
    %c1 = arith.constant 1 : index
    %4 = arith.index_cast %1 : i32 to index
    %5 = vector.load %arg4[%c1, %4] : memref<4x256xf32, #tpu.memory_space<vmem>>, vector<1x256xf32>
    %c2 = arith.constant 2 : index
    %6 = arith.index_cast %1 : i32 to index
    %7 = vector.load %arg4[%c2, %6] : memref<4x256xf32, #tpu.memory_space<vmem>>, vector<1x256xf32>
    %c3 = arith.constant 3 : index
    %8 = arith.index_cast %1 : i32 to index
    %9 = vector.load %arg4[%c3, %8] : memref<4x256xf32, #tpu.memory_space<vmem>>, vector<1x256xf32>
    %10 = arith.addf %3, %7 : vector<1x256xf32>
    %cst = arith.constant 5.000000e-01 : f32
    %11 = vector.broadcast %cst : f32 to vector<1x256xf32>
    %12 = arith.mulf %10, %11 : vector<1x256xf32>
    %13 = arith.addf %5, %9 : vector<1x256xf32>
    %cst_0 = arith.constant 5.000000e-01 : f32
    %14 = vector.broadcast %cst_0 : f32 to vector<1x256xf32>
    %15 = arith.mulf %13, %14 : vector<1x256xf32>
    %16 = arith.subf %7, %3 : vector<1x256xf32>
    %17 = arith.subf %9, %5 : vector<1x256xf32>
    %18 = arith.mulf %16, %17 : vector<1x256xf32>
    %c0_1 = arith.constant 0 : index
    %c0_2 = arith.constant 0 : index
    %19 = arith.index_cast %1 : i32 to index
    %20 = vector.load %arg5[%c0_1, %c0_2, %19] : memref<1x4x256xf32, #tpu.memory_space<vmem>>, vector<1x1x256xf32>
    %21 = vector.shape_cast %20 : vector<1x1x256xf32> to vector<1x256xf32>
    %c0_3 = arith.constant 0 : index
    %c1_4 = arith.constant 1 : index
    %22 = arith.index_cast %1 : i32 to index
    %23 = vector.load %arg5[%c0_3, %c1_4, %22] : memref<1x4x256xf32, #tpu.memory_space<vmem>>, vector<1x1x256xf32>
    %24 = vector.shape_cast %23 : vector<1x1x256xf32> to vector<1x256xf32>
    %c0_5 = arith.constant 0 : index
    %c2_6 = arith.constant 2 : index
    %25 = arith.index_cast %1 : i32 to index
    %26 = vector.load %arg5[%c0_5, %c2_6, %25] : memref<1x4x256xf32, #tpu.memory_space<vmem>>, vector<1x1x256xf32>
    %27 = vector.shape_cast %26 : vector<1x1x256xf32> to vector<1x256xf32>
    %c0_7 = arith.constant 0 : index
    %c3_8 = arith.constant 3 : index
    %28 = arith.index_cast %1 : i32 to index
    %29 = vector.load %arg5[%c0_7, %c3_8, %28] : memref<1x4x256xf32, #tpu.memory_space<vmem>>, vector<1x1x256xf32>
    %30 = vector.shape_cast %29 : vector<1x1x256xf32> to vector<1x256xf32>
    %31 = arith.subf %27, %21 : vector<1x256xf32>
    %32 = arith.subf %30, %24 : vector<1x256xf32>
    %33 = arith.mulf %31, %32 : vector<1x256xf32>
    %c0_i32_9 = arith.constant 0 : i32
    %c16_i32 = arith.constant 16 : i32
    %34 = arith.muli %c0_i32_9, %c16_i32 : i32
    %35 = tpu.assume_multiple %34, 16 : i32
    %c0_10 = arith.constant 0 : index
    %36 = arith.index_cast %35 : i32 to index
    %c0_11 = arith.constant 0 : index
    %37 = vector.load %arg2[%c0_10, %36, %c0_11] : memref<1x16x4xf32, #tpu.memory_space<vmem>>, vector<1x16x4xf32>
    %38 = vector.shape_cast %37 : vector<1x16x4xf32> to vector<16x4xf32>
    %c0_12 = arith.constant 0 : index
    %39 = arith.index_cast %35 : i32 to index
    %c0_13 = arith.constant 0 : index
    %40 = vector.load %arg3[%c0_12, %39, %c0_13] : memref<1x16x1xf32, #tpu.memory_space<vmem>>, vector<1x16x1xf32>
    %41 = vector.shape_cast %40 : vector<1x16x1xf32> to vector<16x1xf32>
    %42 = vector.extract_strided_slice %38 {offsets = [0, 0], sizes = [16, 1], strides = [1, 1]} : vector<16x4xf32> to vector<16x1xf32>
    %43 = vector.extract_strided_slice %38 {offsets = [0, 1], sizes = [16, 1], strides = [1, 1]} : vector<16x4xf32> to vector<16x1xf32>
    %44 = vector.extract_strided_slice %38 {offsets = [0, 2], sizes = [16, 1], strides = [1, 1]} : vector<16x4xf32> to vector<16x1xf32>
    %45 = vector.extract_strided_slice %38 {offsets = [0, 3], sizes = [16, 1], strides = [1, 1]} : vector<16x4xf32> to vector<16x1xf32>
    %46 = arith.subf %44, %42 : vector<16x1xf32>
    %47 = arith.subf %45, %43 : vector<16x1xf32>
    %48 = arith.mulf %46, %47 : vector<16x1xf32>
    %cst_14 = arith.constant 9.99999971E-10 : f32
    %49 = vector.broadcast %cst_14 : f32 to vector<16x1xf32>
    %50 = arith.addf %48, %49 : vector<16x1xf32>
    %51 = vector.broadcast %44 : vector<16x1xf32> to vector<16x256xf32>
    %52 = vector.broadcast %7 : vector<1x256xf32> to vector<16x256xf32>
    %53 = arith.minimumf %51, %52 : vector<16x256xf32>
    %54 = vector.broadcast %42 : vector<16x1xf32> to vector<16x256xf32>
    %55 = vector.broadcast %3 : vector<1x256xf32> to vector<16x256xf32>
    %56 = arith.maximumf %54, %55 : vector<16x256xf32>
    %57 = arith.subf %53, %56 : vector<16x256xf32>
    %cst_15 = arith.constant 0.000000e+00 : f32
    %58 = vector.broadcast %cst_15 : f32 to vector<16x256xf32>
    %59 = arith.maximumf %57, %58 : vector<16x256xf32>
    %60 = vector.broadcast %45 : vector<16x1xf32> to vector<16x256xf32>
    %61 = vector.broadcast %9 : vector<1x256xf32> to vector<16x256xf32>
    %62 = arith.minimumf %60, %61 : vector<16x256xf32>
    %63 = vector.broadcast %43 : vector<16x1xf32> to vector<16x256xf32>
    %64 = vector.broadcast %5 : vector<1x256xf32> to vector<16x256xf32>
    %65 = arith.maximumf %63, %64 : vector<16x256xf32>
    %66 = arith.subf %62, %65 : vector<16x256xf32>
    %cst_16 = arith.constant 0.000000e+00 : f32
    %67 = vector.broadcast %cst_16 : f32 to vector<16x256xf32>
    %68 = arith.maximumf %66, %67 : vector<16x256xf32>
    %69 = arith.mulf %59, %68 : vector<16x256xf32>
    %70 = vector.broadcast %50 : vector<16x1xf32> to vector<16x256xf32>
    %71 = vector.broadcast %18 : vector<1x256xf32> to vector<16x256xf32>
    %72 = arith.addf %70, %71 : vector<16x256xf32>
    %73 = arith.subf %72, %69 : vector<16x256xf32>
    %74 = tpu.reciprocal %73 {approx = true} : vector<16x256xf32> -> vector<16x256xf32>
    %75 = arith.mulf %69, %74 : vector<16x256xf32>
    %c0_17 = arith.constant 0 : index
    %76 = arith.index_cast %35 : i32 to index
    %77 = arith.index_cast %1 : i32 to index
    %78 = vector.load %arg6[%c0_17, %76, %77] : memref<1x16x256xf32, #tpu.memory_space<vmem>>, vector<1x16x256xf32>
    %79 = vector.shape_cast %78 : vector<1x16x256xf32> to vector<16x256xf32>
    %80 = vector.shape_cast %75 : vector<16x256xf32> to vector<1x16x256xf32>
    tpu.vector_store %arg6[%c0_17, %76, %77], %80 {strides = array<i32>} : memref<1x16x256xf32, #tpu.memory_space<vmem>>, vector<1x16x256xf32>,
    %81 = arith.addf %42, %44 : vector<16x1xf32>
    %cst_18 = arith.constant 5.000000e-01 : f32
    %82 = vector.broadcast %cst_18 : f32 to vector<16x1xf32>
    %83 = arith.mulf %81, %82 : vector<16x1xf32>
    %84 = arith.addf %43, %45 : vector<16x1xf32>
    %cst_19 = arith.constant 5.000000e-01 : f32
    %85 = vector.broadcast %cst_19 : f32 to vector<16x1xf32>
    %86 = arith.mulf %84, %85 : vector<16x1xf32>
    %87 = vector.broadcast %83 : vector<16x1xf32> to vector<16x256xf32>
    %88 = vector.broadcast %12 : vector<1x256xf32> to vector<16x256xf32>
    %89 = arith.subf %87, %88 : vector<16x256xf32>
    %90 = vector.broadcast %86 : vector<16x1xf32> to vector<16x256xf32>
    %91 = vector.broadcast %15 : vector<1x256xf32> to vector<16x256xf32>
    %92 = arith.subf %90, %91 : vector<16x256xf32>
    %93 = arith.mulf %89, %89 : vector<16x256xf32>
    %94 = arith.mulf %92, %92 : vector<16x256xf32>
    %95 = arith.addf %93, %94 : vector<16x256xf32>
    %c0_20 = arith.constant 0 : index
    %96 = arith.index_cast %35 : i32 to index
    %97 = arith.index_cast %1 : i32 to index
    %98 = vector.load %arg7[%c0_20, %96, %97] : memref<1x16x256xf32, #tpu.memory_space<vmem>>, vector<1x16x256xf32>
    %99 = vector.shape_cast %98 : vector<1x16x256xf32> to vector<16x256xf32>
    %100 = vector.shape_cast %95 : vector<16x256xf32> to vector<1x16x256xf32>
    tpu.vector_store %arg7[%c0_20, %96, %97], %100 {strides = array<i32>} : memref<1x16x256xf32, #tpu.memory_space<vmem>>, vector<1x16x256xf32>,
    %101 = vector.broadcast %12 : vector<1x256xf32> to vector<16x256xf32>
    %102 = vector.broadcast %42 : vector<16x1xf32> to vector<16x256xf32>
    %103 = arith.subf %101, %102 : vector<16x256xf32>
    %104 = vector.broadcast %15 : vector<1x256xf32> to vector<16x256xf32>
    %105 = vector.broadcast %43 : vector<16x1xf32> to vector<16x256xf32>
    %106 = arith.subf %104, %105 : vector<16x256xf32>
    %107 = arith.minimumf %103, %106 : vector<16x256xf32>
    %108 = vector.broadcast %44 : vector<16x1xf32> to vector<16x256xf32>
    %109 = vector.broadcast %12 : vector<1x256xf32> to vector<16x256xf32>
    %110 = arith.subf %108, %109 : vector<16x256xf32>
    %111 = vector.broadcast %45 : vector<16x1xf32> to vector<16x256xf32>
    %112 = vector.broadcast %15 : vector<1x256xf32> to vector<16x256xf32>
    %113 = arith.subf %111, %112 : vector<16x256xf32>
    %114 = arith.minimumf %110, %113 : vector<16x256xf32>
    %115 = arith.minimumf %107, %114 : vector<16x256xf32>
    %cst_21 = arith.constant 9.99999971E-10 : f32
    %116 = vector.broadcast %cst_21 : f32 to vector<16x256xf32>
    %117 = arith.cmpf ogt, %115, %116 : vector<16x256xf32>
    %cst_22 = arith.constant 0.000000e+00 : f32
    %118 = vector.shape_cast %41 : vector<16x1xf32> to vector<16x1xf32>
    %119 = vector.broadcast %118 : vector<16x1xf32> to vector<16x256xf32>
    %120 = vector.broadcast %cst_22 : f32 to vector<16x256xf32>
    %121 = arith.select %117, %119, %120 : vector<16x256xi1>, vector<16x256xf32>
    %122 = arith.truncf %121 : vector<16x256xf32> to vector<16x256xbf16>
    %c0_23 = arith.constant 0 : index
    %123 = arith.index_cast %35 : i32 to index
    %124 = arith.index_cast %1 : i32 to index
    %125 = vector.load %arg8[%c0_23, %123, %124] : memref<1x16x256xbf16, #tpu.memory_space<vmem>>, vector<1x16x256xbf16>
    %126 = vector.shape_cast %125 : vector<1x16x256xbf16> to vector<16x256xbf16>
    %127 = vector.shape_cast %122 : vector<16x256xbf16> to vector<1x16x256xbf16>
    tpu.vector_store %arg8[%c0_23, %123, %124], %127 {strides = array<i32>} : memref<1x16x256xbf16, #tpu.memory_space<vmem>>, vector<1x16x256xbf16>,
    %128 = vector.broadcast %44 : vector<16x1xf32> to vector<16x256xf32>
    %129 = vector.broadcast %27 : vector<1x256xf32> to vector<16x256xf32>
    %130 = arith.minimumf %128, %129 : vector<16x256xf32>
    %131 = vector.broadcast %42 : vector<16x1xf32> to vector<16x256xf32>
    %132 = vector.broadcast %21 : vector<1x256xf32> to vector<16x256xf32>
    %133 = arith.maximumf %131, %132 : vector<16x256xf32>
    %134 = arith.subf %130, %133 : vector<16x256xf32>
    %cst_24 = arith.constant 0.000000e+00 : f32
    %135 = vector.broadcast %cst_24 : f32 to vector<16x256xf32>
    %136 = arith.maximumf %134, %135 : vector<16x256xf32>
    %137 = vector.broadcast %45 : vector<16x1xf32> to vector<16x256xf32>
    %138 = vector.broadcast %30 : vector<1x256xf32> to vector<16x256xf32>
    %139 = arith.minimumf %137, %138 : vector<16x256xf32>
    %140 = vector.broadcast %43 : vector<16x1xf32> to vector<16x256xf32>
    %141 = vector.broadcast %24 : vector<1x256xf32> to vector<16x256xf32>
    %142 = arith.maximumf %140, %141 : vector<16x256xf32>
    %143 = arith.subf %139, %142 : vector<16x256xf32>
    %cst_25 = arith.constant 0.000000e+00 : f32
    %144 = vector.broadcast %cst_25 : f32 to vector<16x256xf32>
    %145 = arith.maximumf %143, %144 : vector<16x256xf32>
    %146 = arith.mulf %136, %145 : vector<16x256xf32>
    %147 = vector.broadcast %50 : vector<16x1xf32> to vector<16x256xf32>
    %148 = vector.broadcast %33 : vector<1x256xf32> to vector<16x256xf32>
    %149 = arith.addf %147, %148 : vector<16x256xf32>
    %150 = arith.subf %149, %146 : vector<16x256xf32>
    %151 = tpu.reciprocal %150 {approx = true} : vector<16x256xf32> -> vector<16x256xf32>
    %152 = arith.mulf %146, %151 : vector<16x256xf32>
    %153 = arith.truncf %152 : vector<16x256xf32> to vector<16x256xbf16>
    %c0_26 = arith.constant 0 : index
    %154 = arith.index_cast %35 : i32 to index
    %155 = arith.index_cast %1 : i32 to index
    %156 = vector.load %arg9[%c0_26, %154, %155] : memref<1x16x256xbf16, #tpu.memory_space<vmem>>, vector<1x16x256xbf16>
    %157 = vector.shape_cast %156 : vector<1x16x256xbf16> to vector<16x256xbf16>
    %158 = vector.shape_cast %153 : vector<16x256xbf16> to vector<1x16x256xbf16>
    tpu.vector_store %arg9[%c0_26, %154, %155], %158 {strides = array<i32>} : memref<1x16x256xbf16, #tpu.memory_space<vmem>>, vector<1x16x256xbf16>,
    %c1_i32 = arith.constant 1 : i32
    %c1_i32_27 = arith.constant 1 : i32
    return
  }
  func.func @transform_0(%arg0: i32, %arg1: i32) -> (i32, i32, i32) {
    %c0_i32 = arith.constant 0 : i32
    %c0_i32_0 = arith.constant 0 : i32
    %c0_i32_1 = arith.constant 0 : i32
    return %arg0, %c0_i32, %c0_i32_0 : i32, i32, i32
  }
  func.func @transform_1(%arg0: i32, %arg1: i32) -> (i32, i32, i32) {
    %c0_i32 = arith.constant 0 : i32
    %c0_i32_0 = arith.constant 0 : i32
    %c0_i32_1 = arith.constant 0 : i32
    return %arg0, %c0_i32, %c0_i32_0 : i32, i32, i32
  }
  func.func @transform_2(%arg0: i32, %arg1: i32) -> (i32, i32) {
    %c0_i32 = arith.constant 0 : i32
    %c0_i32_0 = arith.constant 0 : i32
    return %c0_i32, %arg1 : i32, i32
  }
  func.func @transform_3(%arg0: i32, %arg1: i32) -> (i32, i32, i32) {
    %c0_i32 = arith.constant 0 : i32
    %c0_i32_0 = arith.constant 0 : i32
    return %arg0, %c0_i32, %arg1 : i32, i32, i32
  }
  func.func @transform_4(%arg0: i32, %arg1: i32) -> (i32, i32, i32) {
    %c0_i32 = arith.constant 0 : i32
    %c0_i32_0 = arith.constant 0 : i32
    return %arg0, %c0_i32, %arg1 : i32, i32, i32
  }
  func.func @transform_5(%arg0: i32, %arg1: i32) -> (i32, i32, i32) {
    %c0_i32 = arith.constant 0 : i32
    %c0_i32_0 = arith.constant 0 : i32
    return %arg0, %c0_i32, %arg1 : i32, i32, i32
  }
  func.func @transform_6(%arg0: i32, %arg1: i32) -> (i32, i32, i32) {
    %c0_i32 = arith.constant 0 : i32
    %c0_i32_0 = arith.constant 0 : i32
    return %arg0, %c0_i32, %arg1 : i32, i32, i32
  }
  func.func @transform_7(%arg0: i32, %arg1: i32) -> (i32, i32, i32) {
    %c0_i32 = arith.constant 0 : i32
    %c0_i32_0 = arith.constant 0 : i32
    return %arg0, %c0_i32, %arg1 : i32, i32, i32
  }
}

</mosaic_0001>

<llo_original>
// kernel: forward.1
$region0: #{forward.1}
  #allocation0 [shape = 'u32[]', space=smem, size = 0x4, offset = 0x4, fixed_abs, tag = 'smem constant byte address 0x4 - core index']
  #allocation1 [shape = 'u32[144,128]{1,0:T(1,128)}', space=vmem, size = 0x12000, scoped, tag = 'internal scratch']
  %s0 = inlined_call_operand.vmem [shape: f32[2,16,4], index: 0, kind: input, shape index: {}]
  %s1 = inlined_call_operand.vmem [shape: f32[2,16,1], index: 1, kind: input, shape index: {}]
  %s2 = inlined_call_operand.vmem [shape: f32[4,512], index: 2, kind: input, shape index: {}]
  %s3 = inlined_call_operand.vmem [shape: f32[2,4,512], index: 3, kind: input, shape index: {}]
  %s4 = inlined_call_operand.vmem [shape: f32[2,16,512], index: 4, kind: output, shape index: {0}]
  %s5 = inlined_call_operand.vmem [shape: f32[2,16,512], index: 5, kind: output, shape index: {1}]
  %s6 = inlined_call_operand.vmem [shape: bf16[2,16,512], index: 6, kind: output, shape index: {2}]
  %s7 = inlined_call_operand.vmem [shape: bf16[2,16,512], index: 7, kind: output, shape index: {3}]
  %8 = xla_tuple %s4, %s5, %s6, %s7
  %s9 = sld [smem:[#allocation0]]
  $region179: #{forward.1} parent=0
    _
  %s11 = ssub.s32 1, %s9
  %s12 = scalar_select 0, %s11, %s9
  $region1: #{forward.1} parent=0
    #allocation2 [shape = 'u8[32768]{0}', space=vmem, size = 0x8000, scoped, tag = 'output window, operand 0']
    #allocation3 [shape = 'u8[32768]{0}', space=vmem, size = 0x8000, scoped, tag = 'output window, operand 1']
    #allocation4 [shape = 'u8[16384]{0}', space=vmem, size = 0x4000, scoped, tag = 'output window, operand 2']
    #allocation5 [shape = 'u8[16384]{0}', space=vmem, size = 0x4000, scoped, tag = 'output window, operand 3']
    loop: start=0, step=1, limit=6
    $region2: #{forward.1} parent=1 // loop_pre_header
      _
    $region3: #{forward.1} parent=1 // loop_header
      %s14 = sphi 0, %s18
      %p15 = scmp.ge.s32.totalorder %s14, 6
      %s21 = sphi 0, %s33
      %s22 = sphi 0, %s29
      %s23 = sphi 0, %s21
      %s24 = sphi 0, %s22
      %s25 = sphi 0, %s23
      %s26 = sphi 0, %s24
      %s36 = sphi 0, %s38
      %s39 = sphi 0, %s36
      %s40 = sphi 0, %s39
      %s56 = sphi 0, %s40
      %s62 = sphi 0, %s64
      %s65 = sphi 0, %s62
      %s66 = sphi 0, %s65
      %s82 = sphi 0, %s66
      %s88 = sphi 0, %s90
      %s91 = sphi 0, %s88
      %s92 = sphi 0, %s91
      %s108 = sphi 0, %s92
      %s116 = sphi 0, %s118
      %s119 = sphi 0, %s116
      %s120 = sphi 0, %s119
      %s136 = sphi 0, %s120
      %s144 = sphi 0, %s146
      %s147 = sphi 0, %s144
      %s148 = sphi 0, %s147
      %s164 = sphi 0, %s148
      %s172 = sphi 0, %s174
      %s175 = sphi 0, %s172
      %s176 = sphi 0, %s175
      %s192 = sphi 0, %s176
      %s200 = sphi 0, %s202
      %s203 = sphi 0, %s200
      %s204 = sphi 0, %s203
      %s220 = sphi 0, %s204
      %s228 = sphi 0, %s230
      %s231 = sphi 0, %s228
      %s232 = sphi 0, %s231
      %s248 = sphi 0, %s232
    $region4: #{forward.1} parent=1 // loop_header_branch
      %17 = sbr.rel (%p15) target = $region8
    $region5: #{forward.1} parent=1 // loop_body
      %s19 = ssub.s32 %s14, 1
      %s20 = ssub.s32 %s14, 2
      %s27 = sadd.s32 1, %s22
      %p28 = scmp.ge.s32.totalorder %s27, 2
      %s29 = scalar_select %p28, 0, %s27
      %s30 = sadd.s32 1, %s21
      %s31 = scalar_select %p28, %s30, %s21
      %p32 = scmp.ge.s32.totalorder %s31, 2
      %s33 = scalar_select %p32, 0, %s31
      %s34 = ssub.s32 %s21, %s33
      %p35 = scmp.eq.s32.totalorder %s34, 0
      %s37 = sadd.s32 %s36, 1
      %s38 = scalar_select %p35, %s36, %s37
      %p41 = pneg %p35
      %p42 = scmp.eq.s32.totalorder %s14, 3
      %p43 = por %p41, %p42
      %p44 = scmp.ne.s32.totalorder %s36, %s39
      %p45 = scmp.eq.s32.totalorder %s14, 0
      %p46 = por %p44, %p45
      %p47 = scmp.ne.s32.totalorder %s36, %s39
      %p48 = scmp.eq.s32.totalorder %s19, 3
      %p49 = por %p47, %p48
      %p50 = scmp.ne.s32.totalorder %s39, %s40
      %p51 = scmp.eq.s32.totalorder %s19, 0
      %p52 = por %p50, %p51
      %p53 = scmp.ne.s32.totalorder %s39, %s40
      %p54 = scmp.eq.s32.totalorder %s20, 3
      %p55 = por %p53, %p54
      %p57 = scmp.ne.s32.totalorder %s40, %s56
      %p58 = scmp.eq.s32.totalorder %s20, 0
      %p59 = por %p57, %p58
      %s60 = ssub.s32 %s21, %s33
      %p61 = scmp.eq.s32.totalorder %s60, 0
      %s63 = sadd.s32 %s62, 1
      %s64 = scalar_select %p61, %s62, %s63
      %p67 = pneg %p61
      %p68 = scmp.eq.s32.totalorder %s14, 3
      %p69 = por %p67, %p68
      %p70 = scmp.ne.s32.totalorder %s62, %s65
      %p71 = scmp.eq.s32.totalorder %s14, 0
      %p72 = por %p70, %p71
      %p73 = scmp.ne.s32.totalorder %s62, %s65
      %p74 = scmp.eq.s32.totalorder %s19, 3
      %p75 = por %p73, %p74
      %p76 = scmp.ne.s32.totalorder %s65, %s66
      %p77 = scmp.eq.s32.totalorder %s19, 0
      %p78 = por %p76, %p77
      %p79 = scmp.ne.s32.totalorder %s65, %s66
      %p80 = scmp.eq.s32.totalorder %s20, 3
      %p81 = por %p79, %p80
      %p83 = scmp.ne.s32.totalorder %s66, %s82
      %p84 = scmp.eq.s32.totalorder %s20, 0
      %p85 = por %p83, %p84
      %s86 = ssub.s32 %s22, %s29
      %p87 = scmp.eq.s32.totalorder %s86, 0
      %s89 = sadd.s32 %s88, 1
      %s90 = scalar_select %p87, %s88, %s89
      %p93 = pneg %p87
      %p94 = scmp.eq.s32.totalorder %s14, 3
      %p95 = por %p93, %p94
      %p96 = scmp.ne.s32.totalorder %s88, %s91
      %p97 = scmp.eq.s32.totalorder %s14, 0
      %p98 = por %p96, %p97
      %p99 = scmp.ne.s32.totalorder %s88, %s91
      %p100 = scmp.eq.s32.totalorder %s19, 3
      %p101 = por %p99, %p100
      %p102 = scmp.ne.s32.totalorder %s91, %s92
      %p103 = scmp.eq.s32.totalorder %s19, 0
      %p104 = por %p102, %p103
      %p105 = scmp.ne.s32.totalorder %s91, %s92
      %p106 = scmp.eq.s32.totalorder %s20, 3
      %p107 = por %p105, %p106
      %p109 = scmp.ne.s32.totalorder %s92, %s108
      %p110 = scmp.eq.s32.totalorder %s20, 0
      %p111 = por %p109, %p110
      %s112 = ssub.s32 %s21, %s33
      %s113 = ssub.s32 %s22, %s29
      %s114 = sor.u32 %s112, %s113
      %p115 = scmp.eq.s32.totalorder %s114, 0
      %s117 = sadd.s32 %s116, 1
      %s118 = scalar_select %p115, %s116, %s117
      %p121 = pneg %p115
      %p122 = scmp.eq.s32.totalorder %s14, 3
      %p123 = por %p121, %p122
      %p124 = scmp.ne.s32.totalorder %s116, %s119
      %p125 = scmp.eq.s32.totalorder %s14, 0
      %p126 = por %p124, %p125
      %p127 = scmp.ne.s32.totalorder %s116, %s119
      %p128 = scmp.eq.s32.totalorder %s19, 3
      %p129 = por %p127, %p128
      %p130 = scmp.ne.s32.totalorder %s119, %s120
      %p131 = scmp.eq.s32.totalorder %s19, 0
      %p132 = por %p130, %p131
      %p133 = scmp.ne.s32.totalorder %s119, %s120
      %p134 = scmp.eq.s32.totalorder %s20, 3
      %p135 = por %p133, %p134
      %p137 = scmp.ne.s32.totalorder %s120, %s136
      %p138 = scmp.eq.s32.totalorder %s20, 0
      %p139 = por %p137, %p138
      %s140 = ssub.s32 %s21, %s33
      %s141 = ssub.s32 %s22, %s29
      %s142 = sor.u32 %s140, %s141
      %p143 = scmp.eq.s32.totalorder %s142, 0
      %s145 = sadd.s32 %s144, 1
      %s146 = scalar_select %p143, %s144, %s145
      %p149 = pneg %p143
      %p150 = scmp.eq.s32.totalorder %s14, 3
      %p151 = por %p149, %p150
      %p152 = scmp.ne.s32.totalorder %s144, %s147
      %p153 = scmp.eq.s32.totalorder %s14, 0
      %p154 = por %p152, %p153
      %p155 = scmp.ne.s32.totalorder %s144, %s147
      %p156 = scmp.eq.s32.totalorder %s19, 3
      %p157 = por %p155, %p156
      %p158 = scmp.ne.s32.totalorder %s147, %s148
      %p159 = scmp.eq.s32.totalorder %s19, 0
      %p160 = por %p158, %p159
      %p161 = scmp.ne.s32.totalorder %s147, %s148
      %p162 = scmp.eq.s32.totalorder %s20, 3
      %p163 = por %p161, %p162
      %p165 = scmp.ne.s32.totalorder %s148, %s164
      %p166 = scmp.eq.s32.totalorder %s20, 0
      %p167 = por %p165, %p166
      %s168 = ssub.s32 %s21, %s33
      %s169 = ssub.s32 %s22, %s29
      %s170 = sor.u32 %s168, %s169
      %p171 = scmp.eq.s32.totalorder %s170, 0
      %s173 = sadd.s32 %s172, 1
      %s174 = scalar_select %p171, %s172, %s173
      %p177 = pneg %p171
      %p178 = scmp.eq.s32.totalorder %s14, 3
      %p179 = por %p177, %p178
      %p180 = scmp.ne.s32.totalorder %s172, %s175
      %p181 = scmp.eq.s32.totalorder %s14, 0
      %p182 = por %p180, %p181
      %p183 = scmp.ne.s32.totalorder %s172, %s175
      %p184 = scmp.eq.s32.totalorder %s19, 3
      %p185 = por %p183, %p184
      %p186 = scmp.ne.s32.totalorder %s175, %s176
      %p187 = scmp.eq.s32.totalorder %s19, 0
      %p188 = por %p186, %p187
      %p189 = scmp.ne.s32.totalorder %s175, %s176
      %p190 = scmp.eq.s32.totalorder %s20, 3
      %p191 = por %p189, %p190
      %p193 = scmp.ne.s32.totalorder %s176, %s192
      %p194 = scmp.eq.s32.totalorder %s20, 0
      %p195 = por %p193, %p194
      %s196 = ssub.s32 %s21, %s33
      %s197 = ssub.s32 %s22, %s29
      %s198 = sor.u32 %s196, %s197
      %p199 = scmp.eq.s32.totalorder %s198, 0
      %s201 = sadd.s32 %s200, 1
      %s202 = scalar_select %p199, %s200, %s201
      %p205 = pneg %p199
      %p206 = scmp.eq.s32.totalorder %s14, 3
      %p207 = por %p205, %p206
      %p208 = scmp.ne.s32.totalorder %s200, %s203
      %p209 = scmp.eq.s32.totalorder %s14, 0
      %p210 = por %p208, %p209
      %p211 = scmp.ne.s32.totalorder %s200, %s203
      %p212 = scmp.eq.s32.totalorder %s19, 3
      %p213 = por %p211, %p212
      %p214 = scmp.ne.s32.totalorder %s203, %s204
      %p215 = scmp.eq.s32.totalorder %s19, 0
      %p216 = por %p214, %p215
      %p217 = scmp.ne.s32.totalorder %s203, %s204
      %p218 = scmp.eq.s32.totalorder %s20, 3
      %p219 = por %p217, %p218
      %p221 = scmp.ne.s32.totalorder %s204, %s220
      %p222 = scmp.eq.s32.totalorder %s20, 0
      %p223 = por %p221, %p222
      %s224 = ssub.s32 %s21, %s33
      %s225 = ssub.s32 %s22, %s29
      %s226 = sor.u32 %s224, %s225
      %p227 = scmp.eq.s32.totalorder %s226, 0
      %s229 = sadd.s32 %s228, 1
      %s230 = scalar_select %p227, %s228, %s229
      %p233 = pneg %p227
      %p234 = scmp.eq.s32.totalorder %s14, 3
      %p235 = por %p233, %p234
      %p236 = scmp.ne.s32.totalorder %s228, %s231
      %p237 = scmp.eq.s32.totalorder %s14, 0
      %p238 = por %p236, %p237
      %p239 = scmp.ne.s32.totalorder %s228, %s231
      %p240 = scmp.eq.s32.totalorder %s19, 3
      %p241 = por %p239, %p240
      %p242 = scmp.ne.s32.totalorder %s231, %s232
      %p243 = scmp.eq.s32.totalorder %s19, 0
      %p244 = por %p242, %p243
      %p245 = scmp.ne.s32.totalorder %s231, %s232
      %p246 = scmp.eq.s32.totalorder %s20, 3
      %p247 = por %p245, %p246
      %p249 = scmp.ne.s32.totalorder %s232, %s248
      %p250 = scmp.eq.s32.totalorder %s20, 0
      %p251 = por %p249, %p250
      %p252 = scmp.le.s32.totalorder 1, %s14
      %p253 = scmp.lt.s32.totalorder %s14, 5
      %p254 = pnand %p252, %p253
      %p255 = pneg %p254
      // Predicated region
      $region9: #{forward.1} parent=5 // pred_check
        _
      $region10: #{forward.1} parent=5 // pred_check_branch
        %257 = sbr.rel (%p254) target = $region12
      $region11: #{forward.1} parent=5 // pred_region
        %s258 = ssub.s32 %s14, 1
      $region12: #{forward.1} parent=5 // pred_fallthru
        _
      %p259 = scmp.lt.s32.totalorder %s14, 4
      // Predicated region
      $region13: #{forward.1} parent=5 // pred_check
        %p260 = pneg %p259
      $region14: #{forward.1} parent=5 // pred_check_branch
        %262 = sbr.rel (%p260) target = $region16
      $region15: #{forward.1} parent=5 // pred_region
        // Predicated region
        $region17: #{forward.1} parent=15 // pred_check
          %p263 = pneg %p46
        $region18: #{forward.1} parent=15 // pred_check_branch
          %265 = sbr.rel (%p263) target = $region20
        $region19: #{forward.1} parent=15 // pred_region
          %p266 = scmp.lt.s32.totalorder %s21, 1
          %s267 = scalar_select %p266, %s21, 1
          %s268 = smul.addr %s267, 2
          %s269 = smul.addr %s268, 8
          %s270 = scalar_lea.vmem %s0, %s269
        $region20: #{forward.1} parent=15 // pred_fallthru
          _
        // Predicated region
        $region21: #{forward.1} parent=15 // pred_check
          %p271 = pneg %p72
        $region22: #{forward.1} parent=15 // pred_check_branch
          %273 = sbr.rel (%p271) target = $region24
        $region23: #{forward.1} parent=15 // pred_region
          %p274 = scmp.lt.s32.totalorder %s21, 1
          %s275 = scalar_select %p274, %s21, 1
          %s276 = smul.addr %s275, 2
          %s277 = smul.addr %s276, 8
          %s278 = scalar_lea.vmem %s1, %s277
        $region24: #{forward.1} parent=15 // pred_fallthru
          _
        // Predicated region
        $region25: #{forward.1} parent=15 // pred_check
          %p279 = pneg %p98
        $region26: #{forward.1} parent=15 // pred_check_branch
          %281 = sbr.rel (%p279) target = $region28
        $region27: #{forward.1} parent=15 // pred_region
          %s282 = smul.u32 2, %s22
          %p283 = scmp.lt.s32.totalorder %s282, 3
          %s284 = scalar_select %p283, %s282, 3
          %s285 = smul.addr %s284, 4
          %s286 = scalar_lea.vmem %s2, %s285
          %s287 = smul.u32 2, %s22
        $region28: #{forward.1} parent=15 // pred_fallthru
          _
        // Predicated region
        $region29: #{forward.1} parent=15 // pred_check
          %p288 = pneg %p126
        $region30: #{forward.1} parent=15 // pred_check_branch
          %290 = sbr.rel (%p288) target = $region32
        $region31: #{forward.1} parent=15 // pred_region
          %s291 = smul.u32 2, %s22
          %p292 = scmp.lt.s32.totalorder %s21, 1
          %s293 = scalar_select %p292, %s21, 1
          %p294 = scmp.lt.s32.totalorder %s291, 3
          %s295 = scalar_select %p294, %s291, 3
          %s296 = smul.addr %s293, 4
          %s297 = sadd.s32 %s295, %s296
          %s298 = smul.addr %s297, 4
          %s299 = scalar_lea.vmem %s3, %s298
          %s300 = smul.u32 2, %s22
        $region32: #{forward.1} parent=15 // pred_fallthru
          _
      $region16: #{forward.1} parent=5 // pred_fallthru
        _
      %p301 = scmp.le.s32.totalorder 1, %s14
      %p302 = scmp.lt.s32.totalorder %s14, 5
      %p303 = pnand %p301, %p302
      %p304 = pneg %p303
      // Predicated region
      $region33: #{forward.1} parent=5 // pred_check
        _
      $region34: #{forward.1} parent=5 // pred_check_branch
        %306 = sbr.rel (%p303) target = $region36
      $region35: #{forward.1} parent=5 // pred_region
        %s307 = ssub.s32 %s14, 1
        %p308 = scmp.lt.s32.totalorder %s23, 1
        %s309 = scalar_select %p308, %s23, 1
        %s310 = smul.addr %s309, 2
        %s311 = smul.addr %s310, 8
        %s312 = scalar_lea.vmem %s0, %s311
        %p313 = pneg %p52
        %p314 = pneg %p49
        %p315 = scmp.lt.s32.totalorder %s23, 1
        %s316 = scalar_select %p315, %s23, 1
        %s317 = smul.addr %s316, 2
        %s318 = smul.addr %s317, 8
        %s319 = scalar_lea.vmem %s1, %s318
        %p320 = pneg %p78
        %p321 = pneg %p75
        %s322 = smul.u32 2, %s24
        %p323 = scmp.lt.s32.totalorder %s322, 3
        %s324 = scalar_select %p323, %s322, 3
        %s325 = smul.addr %s324, 4
        %s326 = scalar_lea.vmem %s2, %s325
        %p327 = pneg %p104
        %p328 = pneg %p101
        %s329 = smul.u32 2, %s24
        %p330 = scmp.lt.s32.totalorder %s23, 1
        %s331 = scalar_select %p330, %s23, 1
        %p332 = scmp.lt.s32.totalorder %s329, 3
        %s333 = scalar_select %p332, %s329, 3
        %s334 = smul.addr %s331, 4
        %s335 = sadd.s32 %s333, %s334
        %s336 = smul.addr %s335, 4
        %s337 = scalar_lea.vmem %s3, %s336
        %p338 = pneg %p132
        %p339 = pneg %p129
        %p340 = pneg %p160
        %p341 = pneg %p157
        %s342 = sand.u32 %s147, 1
        %s343 = sand.u32 %s147, 1
        %s344 = smul.addr %s343, 32
        %s345 = scalar_lea.vmem [#allocation2], %s344
        %p346 = pneg %p188
        %p347 = pneg %p185
        %s348 = sand.u32 %s175, 1
        %s349 = sand.u32 %s175, 1
        %s350 = smul.addr %s349, 32
        %s351 = scalar_lea.vmem [#allocation3], %s350
        %p352 = pneg %p216
        %p353 = pneg %p213
        %s354 = sand.u32 %s203, 1
        %s355 = sand.u32 %s203, 1
        %s356 = smul.addr %s355, 16
        %s357 = scalar_lea.vmem [#allocation4], %s356
        %p358 = pneg %p244
        %p359 = pneg %p241
        %s360 = sand.u32 %s231, 1
        %s361 = sand.u32 %s231, 1
        %s362 = smul.addr %s361, 16
        %s363 = scalar_lea.vmem [#allocation5], %s362
        %p364 = scmp.lt.s32.totalorder %s23, 1
        %s365 = scalar_select %p364, %s23, 1
        %s366 = smul.addr %s365, 2
        %s367 = smul.addr %s366, 8
        %s368 = scalar_lea.vmem %s0, %s367
        %p369 = scmp.lt.s32.totalorder %s23, 1
        %s370 = scalar_select %p369, %s23, 1
        %s371 = smul.addr %s370, 2
        %s372 = smul.addr %s371, 8
        %s373 = scalar_lea.vmem %s1, %s372
        %s374 = smul.u32 2, %s24
        %p375 = scmp.lt.s32.totalorder %s374, 3
        %s376 = scalar_select %p375, %s374, 3
        %s377 = smul.addr %s376, 4
        %s378 = scalar_lea.vmem %s2, %s377
        %s379 = smul.u32 2, %s24
        %s380 = smul.u32 2, %s24
        %p381 = scmp.lt.s32.totalorder %s23, 1
        %s382 = scalar_select %p381, %s23, 1
        %p383 = scmp.lt.s32.totalorder %s380, 3
        %s384 = scalar_select %p383, %s380, 3
        %s385 = smul.addr %s382, 4
        %s386 = sadd.s32 %s384, %s385
        %s387 = smul.addr %s386, 4
        %s388 = scalar_lea.vmem %s3, %s387
        %s389 = smul.u32 2, %s24
        %s390 = smul.u32 2, %s24
        %s391 = smul.u32 2, %s24
        %s392 = smul.u32 2, %s24
        %s393 = smul.u32 2, %s24
        %v394 = vld [vmem:[%s378] ss:$4 sm:$0x3]
        %s395 = scalar_lea.vmem %s378, 1
        %v396 = vld [vmem:[%s395] ss:$4 sm:$0x3]
        %s397 = scalar_lea.vmem %s378, 2
        %v398 = vld [vmem:[%s397] ss:$4 sm:$0x3]
        %s399 = scalar_lea.vmem %s378, 3
        %v400 = vld [vmem:[%s399] ss:$4 sm:$0x3]
        %v401 = vadd.f32 %v394, %v398
        %v402 = vmul.f32 %v401, 0.5
        %v403 = vadd.f32 %v396, %v400
        %v404 = vmul.f32 %v403, 0.5
        %v405 = vsub.f32 %v398, %v394
        %v406 = vsub.f32 %v400, %v396
        %v407 = vmul.f32 %v405, %v406
        %v408 = vld [vmem:[%s388] ss:$4 sm:$0x3]
        %s409 = scalar_lea.vmem %s388, 1
        %v410 = vld [vmem:[%s409] ss:$4 sm:$0x3]
        %s411 = scalar_lea.vmem %s388, 2
        %v412 = vld [vmem:[%s411] ss:$4 sm:$0x3]
        %s413 = scalar_lea.vmem %s388, 3
        %v414 = vld [vmem:[%s413] ss:$4 sm:$0x3]
        %v415 = vsub.f32 %v412, %v408
        %v416 = vsub.f32 %v414, %v410
        %v417 = vmul.f32 %v415, %v416
        %v418 = vld [vmem:[%s368] sm:$0xff]
        %v419 = vld [vmem:[%s368 + $0x8] sm:$0xff]
        %v420 = vld [vmem:[%s373] sm:$0xff]
        %v421 = vld [vmem:[%s373 + $0x8] sm:$0xff]
        %424 = vrot.lane.b32.xlu0 %v418, 2
        %v425 = vpop.permute.xlu0 %424
        %426 = vrot.lane.b32.xlu0 %v419, 2
        %v427 = vpop.permute.xlu0 %426
        %v430 = vsub.f32 %v418, %v425
        %v431 = vsub.f32 %v419, %v427
        %434 = vrot.lane.b32.xlu0 %v430, 127
        %v435 = vpop.permute.xlu0 %434
        %436 = vrot.lane.b32.xlu0 %v431, 127
        %v437 = vpop.permute.xlu0 %436
        %v440 = vmul.f32 %v430, %v435
        %v441 = vmul.f32 %v431, %v437
        %v442 = vadd.f32 %v440, 1e-09
        %v443 = vadd.f32 %v441, 1e-09
        %444 = vset.pattern.permute.xlu0 2
        %445 = vperm.xlu0 %444, %v418
        %v446 = vpop.permute.xlu0 %445
        %448 = vset.pattern.permute.xlu0 2
        %449 = vperm.xlu0 %448, %v419
        %v450 = vpop.permute.xlu0 %449
        %v453 = vlaneseq
        %v454 = vshrl.u32 %v453, 7
        %v455 = vsub.s32 0, %v454
        %v456 = vrot.slane %v398, %v455
        %v457 = vlaneseq
        %v458 = vshrl.u32 %v457, 7
        %v459 = vsub.s32 1, %v458
        %v460 = vrot.slane %v398, %v459
        %v463 = vmin.f32 %v446, %v456
        %v464 = vmin.f32 %v446, %v460
        %v465 = vmin.f32 %v450, %v456
        %v466 = vmin.f32 %v450, %v460
        %467 = vset.pattern.permute.xlu0 0
        %468 = vperm.xlu0 %467, %v418
        %v469 = vpop.permute.xlu0 %468
        %471 = vset.pattern.permute.xlu0 0
        %472 = vperm.xlu0 %471, %v419
        %v473 = vpop.permute.xlu0 %472
        %v476 = vlaneseq
        %v477 = vshrl.u32 %v476, 7
        %v478 = vsub.s32 0, %v477
        %v479 = vrot.slane %v394, %v478
        %v480 = vlaneseq
        %v481 = vshrl.u32 %v480, 7
        %v482 = vsub.s32 1, %v481
        %v483 = vrot.slane %v394, %v482
        %v486 = vmax.f32 %v469, %v479
        %v487 = vmax.f32 %v469, %v483
        %v488 = vmax.f32 %v473, %v479
        %v489 = vmax.f32 %v473, %v483
        %v490 = vsub.f32 %v463, %v486
        %v491 = vsub.f32 %v464, %v487
        %v492 = vsub.f32 %v465, %v488
        %v493 = vsub.f32 %v466, %v489
        %v494 = vmax.f32 %v490, 0.0
        %v495 = vmax.f32 %v491, 0.0
        %v496 = vmax.f32 %v492, 0.0
        %v497 = vmax.f32 %v493, 0.0
        %498 = vset.pattern.permute.xlu0 3
        %499 = vperm.xlu0 %498, %v418
        %v500 = vpop.permute.xlu0 %499
        %502 = vset.pattern.permute.xlu0 3
        %503 = vperm.xlu0 %502, %v419
        %v504 = vpop.permute.xlu0 %503
        %v507 = vlaneseq
        %v508 = vshrl.u32 %v507, 7
        %v509 = vsub.s32 0, %v508
        %v510 = vrot.slane %v400, %v509
        %v511 = vlaneseq
        %v512 = vshrl.u32 %v511, 7
        %v513 = vsub.s32 1, %v512
        %v514 = vrot.slane %v400, %v513
        %v517 = vmin.f32 %v500, %v510
        %v518 = vmin.f32 %v500, %v514
        %v519 = vmin.f32 %v504, %v510
        %v520 = vmin.f32 %v504, %v514
        %521 = vset.pattern.permute.xlu0 1
        %522 = vperm.xlu0 %521, %v418
        %v523 = vpop.permute.xlu0 %522
        %525 = vset.pattern.permute.xlu0 1
        %526 = vperm.xlu0 %525, %v419
        %v527 = vpop.permute.xlu0 %526
        %v530 = vlaneseq
        %v531 = vshrl.u32 %v530, 7
        %v532 = vsub.s32 0, %v531
        %v533 = vrot.slane %v396, %v532
        %v534 = vlaneseq
        %v535 = vshrl.u32 %v534, 7
        %v536 = vsub.s32 1, %v535
        %v537 = vrot.slane %v396, %v536
        %v540 = vmax.f32 %v523, %v533
        %v541 = vmax.f32 %v523, %v537
        %v542 = vmax.f32 %v527, %v533
        %v543 = vmax.f32 %v527, %v537
        %v544 = vsub.f32 %v517, %v540
        %v545 = vsub.f32 %v518, %v541
        %v546 = vsub.f32 %v519, %v542
        %v547 = vsub.f32 %v520, %v543
        %v548 = vmax.f32 %v544, 0.0
        %v549 = vmax.f32 %v545, 0.0
        %v550 = vmax.f32 %v546, 0.0
        %v551 = vmax.f32 %v547, 0.0
        %v552 = vmul.f32 %v494, %v548
        %v553 = vmul.f32 %v495, %v549
        %v554 = vmul.f32 %v496, %v550
        %v555 = vmul.f32 %v497, %v551
        %557 = vset.pattern.permute.xlu0 2
        %558 = vperm.xlu0 %557, %v442
        %v559 = vpop.permute.xlu0 %558
        %562 = vset.pattern.permute.xlu0 2
        %563 = vperm.xlu0 %562, %v443
        %v564 = vpop.permute.xlu0 %563
        %v567 = vlaneseq
        %v568 = vshrl.u32 %v567, 7
        %v569 = vsub.s32 0, %v568
        %v570 = vrot.slane %v407, %v569
        %v571 = vlaneseq
        %v572 = vshrl.u32 %v571, 7
        %v573 = vsub.s32 1, %v572
        %v574 = vrot.slane %v407, %v573
        %v577 = vadd.f32 %v559, %v570
        %v578 = vadd.f32 %v559, %v574
        %v579 = vadd.f32 %v564, %v570
        %v580 = vadd.f32 %v564, %v574
        %v581 = vsub.f32 %v577, %v552
        %v582 = vsub.f32 %v578, %v553
        %v583 = vsub.f32 %v579, %v554
        %v584 = vsub.f32 %v580, %v555
        %v585 = vrcp.pop %v581
        %v586 = vrcp.pop %v582
        %v587 = vrcp.pop %v583
        %v588 = vrcp.pop %v584
        %v589 = vmul.f32 %v552, %v585
        %v590 = vmul.f32 %v553, %v586
        %v591 = vmul.f32 %v554, %v587
        %v592 = vmul.f32 %v555, %v588
        %s593 = smul.u32 0, 2
        %s594 = sadd.s32 0, %s593
        %s595 = smul.addr %s594, 8
        %s596 = scalar_lea.vmem %s345, %s595 [#allocation2]
        %597 = vst [vmem:[%s596] sm:$0xff] %v589
        %598 = vst [vmem:[%s596 + $0x8] sm:$0xff] %v590
        %599 = vst [vmem:[%s596 + $0x10] sm:$0xff] %v591
        %600 = vst [vmem:[%s596 + $0x18] sm:$0xff] %v592
        %601 = vrot.lane.b32.xlu0 %v418, 126
        %v602 = vpop.permute.xlu0 %601
        %603 = vrot.lane.b32.xlu0 %v419, 126
        %v604 = vpop.permute.xlu0 %603
        %v607 = vadd.f32 %v418, %v602
        %v608 = vadd.f32 %v419, %v604
        %v609 = vmul.f32 %v607, 0.5
        %v610 = vmul.f32 %v608, 0.5
        %612 = vset.pattern.permute.xlu0 0
        %613 = vperm.xlu0 %612, %v609
        %v614 = vpop.permute.xlu0 %613
        %617 = vset.pattern.permute.xlu0 0
        %618 = vperm.xlu0 %617, %v610
        %v619 = vpop.permute.xlu0 %618
        %v622 = vlaneseq
        %v623 = vshrl.u32 %v622, 7
        %v624 = vsub.s32 0, %v623
        %v625 = vrot.slane %v402, %v624
        %v626 = vlaneseq
        %v627 = vshrl.u32 %v626, 7
        %v628 = vsub.s32 1, %v627
        %v629 = vrot.slane %v402, %v628
        %v632 = vsub.f32 %v614, %v625
        %v633 = vsub.f32 %v614, %v629
        %v634 = vsub.f32 %v619, %v625
        %v635 = vsub.f32 %v619, %v629
        %636 = vset.pattern.permute.xlu0 1
        %637 = vperm.xlu0 %636, %v609
        %v638 = vpop.permute.xlu0 %637
        %640 = vset.pattern.permute.xlu0 1
        %641 = vperm.xlu0 %640, %v610
        %v642 = vpop.permute.xlu0 %641
        %v645 = vlaneseq
        %v646 = vshrl.u32 %v645, 7
        %v647 = vsub.s32 0, %v646
        %v648 = vrot.slane %v404, %v647
        %v649 = vlaneseq
        %v650 = vshrl.u32 %v649, 7
        %v651 = vsub.s32 1, %v650
        %v652 = vrot.slane %v404, %v651
        %v655 = vsub.f32 %v638, %v648
        %v656 = vsub.f32 %v638, %v652
        %v657 = vsub.f32 %v642, %v648
        %v658 = vsub.f32 %v642, %v652
        %v659 = vmul.f32 %v632, %v632
        %v660 = vmul.f32 %v633, %v633
        %v661 = vmul.f32 %v634, %v634
        %v662 = vmul.f32 %v635, %v635
        %v663 = vmul.f32 %v655, %v655
        %v664 = vmul.f32 %v656, %v656
        %v665 = vmul.f32 %v657, %v657
        %v666 = vmul.f32 %v658, %v658
        %v667 = vadd.f32 %v659, %v663
        %v668 = vadd.f32 %v660, %v664
        %v669 = vadd.f32 %v661, %v665
        %v670 = vadd.f32 %v662, %v666
        %s671 = smul.addr %s594, 8
        %s672 = scalar_lea.vmem %s351, %s671 [#allocation3]
        %673 = vst [vmem:[%s672] sm:$0xff] %v667
        %674 = vst [vmem:[%s672 + $0x8] sm:$0xff] %v668
        %675 = vst [vmem:[%s672 + $0x10] sm:$0xff] %v669
        %676 = vst [vmem:[%s672 + $0x18] sm:$0xff] %v670
        %v677 = vsub.f32 %v625, %v469
        %v678 = vsub.f32 %v629, %v469
        %v679 = vsub.f32 %v625, %v473
        %v680 = vsub.f32 %v629, %v473
        %v681 = vsub.f32 %v648, %v523
        %v682 = vsub.f32 %v652, %v523
        %v683 = vsub.f32 %v648, %v527
        %v684 = vsub.f32 %v652, %v527
        %v685 = vmin.f32 %v677, %v681
        %v686 = vmin.f32 %v678, %v682
        %v687 = vmin.f32 %v679, %v683
        %v688 = vmin.f32 %v680, %v684
        %v689 = vsub.f32 %v446, %v625
        %v690 = vsub.f32 %v446, %v629
        %v691 = vsub.f32 %v450, %v625
        %v692 = vsub.f32 %v450, %v629
        %v693 = vsub.f32 %v500, %v648
        %v694 = vsub.f32 %v500, %v652
        %v695 = vsub.f32 %v504, %v648
        %v696 = vsub.f32 %v504, %v652
        %v697 = vmin.f32 %v689, %v693
        %v698 = vmin.f32 %v690, %v694
        %v699 = vmin.f32 %v691, %v695
        %v700 = vmin.f32 %v692, %v696
        %v701 = vmin.f32 %v685, %v697
        %v702 = vmin.f32 %v686, %v698
        %v703 = vmin.f32 %v687, %v699
        %v704 = vmin.f32 %v688, %v700
        %vm705 = vcmp.gt.f32.partialorder %v701, 1e-09
        %vm706 = vcmp.gt.f32.partialorder %v702, 1e-09
        %vm707 = vcmp.gt.f32.partialorder %v703, 1e-09
        %vm708 = vcmp.gt.f32.partialorder %v704, 1e-09
        %710 = vset.pattern.permute.xlu0 0
        %711 = vperm.xlu0 %710, %v420
        %v712 = vpop.permute.xlu0 %711
        %715 = vset.pattern.permute.xlu0 0
        %716 = vperm.xlu0 %715, %v421
        %v717 = vpop.permute.xlu0 %716
        %v719 = vsel %vm705, %v712, 0.0
        %v720 = vsel %vm706, %v712, 0.0
        %v721 = vsel %vm707, %v717, 0.0
        %v722 = vsel %vm708, %v717, 0.0
        %v723 = vpack.c.bf16 %v721, %v719
        %v724 = vpack.c.bf16 %v722, %v720
        %v727 = vunpack.c.l.b16 %v723
        %v728 = vunpack.c.l.b16 %v724
        %v729 = vunpack.c.h.b16 %v723
        %v730 = vunpack.c.h.b16 %v724
        %v731 = vpack.c.b16 %v728, %v727
        %v732 = vpack.c.b16 %v730, %v729
        %s735 = smul.addr %s594, 4
        %s736 = scalar_lea.vmem %s357, %s735 [#allocation4]
        %737 = vst [vmem:[%s736] sm:$0xff] %v731
        %738 = vst [vmem:[%s736 + $0x8] sm:$0xff] %v732
        %v740 = vlaneseq
        %v741 = vshrl.u32 %v740, 7
        %v742 = vsub.s32 0, %v741
        %v743 = vrot.slane %v412, %v742
        %v744 = vlaneseq
        %v745 = vshrl.u32 %v744, 7
        %v746 = vsub.s32 1, %v745
        %v747 = vrot.slane %v412, %v746
        %v750 = vmin.f32 %v446, %v743
        %v751 = vmin.f32 %v446, %v747
        %v752 = vmin.f32 %v450, %v743
        %v753 = vmin.f32 %v450, %v747
        %v755 = vlaneseq
        %v756 = vshrl.u32 %v755, 7
        %v757 = vsub.s32 0, %v756
        %v758 = vrot.slane %v408, %v757
        %v759 = vlaneseq
        %v760 = vshrl.u32 %v759, 7
        %v761 = vsub.s32 1, %v760
        %v762 = vrot.slane %v408, %v761
        %v765 = vmax.f32 %v469, %v758
        %v766 = vmax.f32 %v469, %v762
        %v767 = vmax.f32 %v473, %v758
        %v768 = vmax.f32 %v473, %v762
        %v769 = vsub.f32 %v750, %v765
        %v770 = vsub.f32 %v751, %v766
        %v771 = vsub.f32 %v752, %v767
        %v772 = vsub.f32 %v753, %v768
        %v773 = vmax.f32 %v769, 0.0
        %v774 = vmax.f32 %v770, 0.0
        %v775 = vmax.f32 %v771, 0.0
        %v776 = vmax.f32 %v772, 0.0
        %v778 = vlaneseq
        %v779 = vshrl.u32 %v778, 7
        %v780 = vsub.s32 0, %v779
        %v781 = vrot.slane %v414, %v780
        %v782 = vlaneseq
        %v783 = vshrl.u32 %v782, 7
        %v784 = vsub.s32 1, %v783
        %v785 = vrot.slane %v414, %v784
        %v788 = vmin.f32 %v500, %v781
        %v789 = vmin.f32 %v500, %v785
        %v790 = vmin.f32 %v504, %v781
        %v791 = vmin.f32 %v504, %v785
        %v793 = vlaneseq
        %v794 = vshrl.u32 %v793, 7
        %v795 = vsub.s32 0, %v794
        %v796 = vrot.slane %v410, %v795
        %v797 = vlaneseq
        %v798 = vshrl.u32 %v797, 7
        %v799 = vsub.s32 1, %v798
        %v800 = vrot.slane %v410, %v799
        %v803 = vmax.f32 %v523, %v796
        %v804 = vmax.f32 %v523, %v800
        %v805 = vmax.f32 %v527, %v796
        %v806 = vmax.f32 %v527, %v800
        %v807 = vsub.f32 %v788, %v803
        %v808 = vsub.f32 %v789, %v804
        %v809 = vsub.f32 %v790, %v805
        %v810 = vsub.f32 %v791, %v806
        %v811 = vmax.f32 %v807, 0.0
        %v812 = vmax.f32 %v808, 0.0
        %v813 = vmax.f32 %v809, 0.0
        %v814 = vmax.f32 %v810, 0.0
        %v815 = vmul.f32 %v773, %v811
        %v816 = vmul.f32 %v774, %v812
        %v817 = vmul.f32 %v775, %v813
        %v818 = vmul.f32 %v776, %v814
        %v820 = vlaneseq
        %v821 = vshrl.u32 %v820, 7
        %v822 = vsub.s32 0, %v821
        %v823 = vrot.slane %v417, %v822
        %v824 = vlaneseq
        %v825 = vshrl.u32 %v824, 7
        %v826 = vsub.s32 1, %v825
        %v827 = vrot.slane %v417, %v826
        %v830 = vadd.f32 %v559, %v823
        %v831 = vadd.f32 %v559, %v827
        %v832 = vadd.f32 %v564, %v823
        %v833 = vadd.f32 %v564, %v827
        %v834 = vsub.f32 %v830, %v815
        %v835 = vsub.f32 %v831, %v816
        %v836 = vsub.f32 %v832, %v817
        %v837 = vsub.f32 %v833, %v818
        %v838 = vrcp.pop %v834
        %v839 = vrcp.pop %v835
        %v840 = vrcp.pop %v836
        %v841 = vrcp.pop %v837
        %v842 = vmul.f32 %v815, %v838
        %v843 = vmul.f32 %v816, %v839
        %v844 = vmul.f32 %v817, %v840
        %v845 = vmul.f32 %v818, %v841
        %v846 = vpack.c.bf16 %v844, %v842
        %v847 = vpack.c.bf16 %v845, %v843
        %v850 = vunpack.c.l.b16 %v846
        %v851 = vunpack.c.l.b16 %v847
        %v852 = vunpack.c.h.b16 %v846
        %v853 = vunpack.c.h.b16 %v847
        %v854 = vpack.c.b16 %v851, %v850
        %v855 = vpack.c.b16 %v853, %v852
        %s858 = smul.addr %s594, 4
        %s859 = scalar_lea.vmem %s363, %s858 [#allocation5]
        %860 = vst [vmem:[%s859] sm:$0xff] %v854
        %861 = vst [vmem:[%s859 + $0x8] sm:$0xff] %v855
        %s862 = sand.u32 %s147, 1
        %s863 = sand.u32 %s147, 1
        %s864 = smul.addr %s863, 32
        %s865 = scalar_lea.vmem [#allocation2], %s864
        %s866 = sand.u32 %s175, 1
        %s867 = sand.u32 %s175, 1
        %s868 = smul.addr %s867, 32
        %s869 = scalar_lea.vmem [#allocation3], %s868
        %s870 = sand.u32 %s203, 1
        %s871 = sand.u32 %s203, 1
        %s872 = smul.addr %s871, 16
        %s873 = scalar_lea.vmem [#allocation4], %s872
        %s874 = sand.u32 %s231, 1
        %s875 = sand.u32 %s231, 1
        %s876 = smul.addr %s875, 16
        %s877 = scalar_lea.vmem [#allocation5], %s876
        // Predicated region
        $region37: #{forward.1} parent=35 // pred_check
          %p878 = pneg %p157
        $region38: #{forward.1} parent=35 // pred_check_branch
          %880 = sbr.rel (%p878) target = $region40
        $region39: #{forward.1} parent=35 // pred_region
          %s881 = smul.u32 2, %s24
          %s882 = smul.addr %s23, 8
          %s883 = sadd.s32 %s881, %s882
          %s884 = smul.addr %s883, 8
          %s885 = scalar_lea.vmem %s4, %s884
          // Predicated region
          $region41: #{forward.1} parent=39 // pred_check
            _
          $region42: #{forward.1} parent=39 // pred_check_branch
            %887 = sbr.rel (0) target = $region44
          $region43: #{forward.1} parent=39 // pred_region
            // Predicated region
            $region45: #{forward.1} parent=43 // pred_check
              _
            $region46: #{forward.1} parent=43 // pred_check_branch
              %889 = sbr.rel (0) target = $region48
            $region47: #{forward.1} parent=43 // pred_region
              loop: start=0, step=1, limit=1
              $region49: #{forward.1} parent=47 // loop_pre_header
                _
              $region50: #{forward.1} parent=47 // loop_header
                %s891 = sphi 0, %s895
                %p892 = scmp.ge.s32.totalorder %s891, 1
                %s896 = sphi %s865, %s865
                %s897 = sphi %s885, %s885
              $region51: #{forward.1} parent=47 // loop_header_branch
                %894 = sbr.rel (%p892) target = $region55
              $region52: #{forward.1} parent=47 // loop_body
                %v898 = vld [vmem:[%s896] sm:$0xff]
                %899 = vst [vmem:[%s897] sm:$0xff] %v898
                %v900 = vld [vmem:[%s896 + $0x8] sm:$0xff]
                %901 = vst [vmem:[%s897 + $0x8] sm:$0xff] %v900
                %v902 = vld [vmem:[%s896 + $0x10] sm:$0xff]
                %903 = vst [vmem:[%s897 + $0x20] sm:$0xff] %v902
                %v904 = vld [vmem:[%s896 + $0x18] sm:$0xff]
                %905 = vst [vmem:[%s897 + $0x28] sm:$0xff] %v904
              $region53: #{forward.1} parent=47 // loop_footer
                %s895 = sadd.s32 1, %s891
              $region54: #{forward.1} parent=47 // loop_footer_branch
                %890 = sbr.rel target = $region50
              $region55: #{forward.1} parent=47 // loop_exit
                _
            $region48: #{forward.1} parent=43 // pred_fallthru
              _
            // Predicated region
            $region56: #{forward.1} parent=43 // pred_check
              _
            $region57: #{forward.1} parent=43 // pred_check_branch
              %907 = sbr.rel target = $region59
            $region58: #{forward.1} parent=43 // pred_region
              _
            $region59: #{forward.1} parent=43 // pred_fallthru
              _
          $region44: #{forward.1} parent=39 // pred_fallthru
            _
          %908 = vnop
        $region40: #{forward.1} parent=35 // pred_fallthru
          _
        // Predicated region
        $region60: #{forward.1} parent=35 // pred_check
          %p909 = pneg %p185
        $region61: #{forward.1} parent=35 // pred_check_branch
          %911 = sbr.rel (%p909) target = $region63
        $region62: #{forward.1} parent=35 // pred_region
          %s912 = smul.u32 2, %s24
          %s913 = smul.addr %s23, 8
          %s914 = sadd.s32 %s912, %s913
          %s915 = smul.addr %s914, 8
          %s916 = scalar_lea.vmem %s5, %s915
          // Predicated region
          $region64: #{forward.1} parent=62 // pred_check
            _
          $region65: #{forward.1} parent=62 // pred_check_branch
            %918 = sbr.rel (0) target = $region67
          $region66: #{forward.1} parent=62 // pred_region
            // Predicated region
            $region68: #{forward.1} parent=66 // pred_check
              _
            $region69: #{forward.1} parent=66 // pred_check_branch
              %920 = sbr.rel (0) target = $region71
            $region70: #{forward.1} parent=66 // pred_region
              loop: start=0, step=1, limit=1
              $region72: #{forward.1} parent=70 // loop_pre_header
                _
              $region73: #{forward.1} parent=70 // loop_header
                %s922 = sphi 0, %s926
                %p923 = scmp.ge.s32.totalorder %s922, 1
                %s927 = sphi %s869, %s869
                %s928 = sphi %s916, %s916
              $region74: #{forward.1} parent=70 // loop_header_branch
                %925 = sbr.rel (%p923) target = $region78
              $region75: #{forward.1} parent=70 // loop_body
                %v929 = vld [vmem:[%s927] sm:$0xff]
                %930 = vst [vmem:[%s928] sm:$0xff] %v929
                %v931 = vld [vmem:[%s927 + $0x8] sm:$0xff]
                %932 = vst [vmem:[%s928 + $0x8] sm:$0xff] %v931
                %v933 = vld [vmem:[%s927 + $0x10] sm:$0xff]
                %934 = vst [vmem:[%s928 + $0x20] sm:$0xff] %v933
                %v935 = vld [vmem:[%s927 + $0x18] sm:$0xff]
                %936 = vst [vmem:[%s928 + $0x28] sm:$0xff] %v935
              $region76: #{forward.1} parent=70 // loop_footer
                %s926 = sadd.s32 1, %s922
              $region77: #{forward.1} parent=70 // loop_footer_branch
                %921 = sbr.rel target = $region73
              $region78: #{forward.1} parent=70 // loop_exit
                _
            $region71: #{forward.1} parent=66 // pred_fallthru
              _
            // Predicated region
            $region79: #{forward.1} parent=66 // pred_check
              _
            $region80: #{forward.1} parent=66 // pred_check_branch
              %938 = sbr.rel target = $region82
            $region81: #{forward.1} parent=66 // pred_region
              _
            $region82: #{forward.1} parent=66 // pred_fallthru
              _
          $region67: #{forward.1} parent=62 // pred_fallthru
            _
          %939 = vnop
        $region63: #{forward.1} parent=35 // pred_fallthru
          _
        // Predicated region
        $region83: #{forward.1} parent=35 // pred_check
          %p940 = pneg %p213
        $region84: #{forward.1} parent=35 // pred_check_branch
          %942 = sbr.rel (%p940) target = $region86
        $region85: #{forward.1} parent=35 // pred_region
          %s943 = smul.u32 2, %s24
          %s944 = smul.addr %s23, 8
          %s945 = sadd.s32 %s943, %s944
          %s946 = smul.addr %s945, 4
          %s947 = scalar_lea.vmem %s6, %s946
          // Predicated region
          $region87: #{forward.1} parent=85 // pred_check
            _
          $region88: #{forward.1} parent=85 // pred_check_branch
            %949 = sbr.rel (0) target = $region90
          $region89: #{forward.1} parent=85 // pred_region
            // Predicated region
            $region91: #{forward.1} parent=89 // pred_check
              _
            $region92: #{forward.1} parent=89 // pred_check_branch
              %951 = sbr.rel (0) target = $region94
            $region93: #{forward.1} parent=89 // pred_region
              // Predicated region
              $region106: #{forward.1} parent=93 // pred_check
                _
              $region107: #{forward.1} parent=93 // pred_check_branch
                %968 = sbr.rel (0) target = $region109
              $region108: #{forward.1} parent=93 // pred_region
                loop: start=0, step=1, limit=1
                $region110: #{forward.1} parent=108 // loop_pre_header
                  _
                $region111: #{forward.1} parent=108 // loop_header
                  %s970 = sphi 0, %s974
                  %p971 = scmp.ge.s32.totalorder %s970, 1
                  %s975 = sphi %s873, %s873
                  %s976 = sphi %s947, %s947
                $region112: #{forward.1} parent=108 // loop_header_branch
                  %973 = sbr.rel (%p971) target = $region116
                $region113: #{forward.1} parent=108 // loop_body
                  %v977 = vld [vmem:[%s975] sm:$0xff]
                  %978 = vst [vmem:[%s976] sm:$0xff] %v977
                  %v979 = vld [vmem:[%s975 + $0x8] sm:$0xff]
                  %980 = vst [vmem:[%s976 + $0x10] sm:$0xff] %v979
                $region114: #{forward.1} parent=108 // loop_footer
                  %s974 = sadd.s32 1, %s970
                $region115: #{forward.1} parent=108 // loop_footer_branch
                  %969 = sbr.rel target = $region111
                $region116: #{forward.1} parent=108 // loop_exit
                  _
              $region109: #{forward.1} parent=93 // pred_fallthru
                _
              // Predicated region
              $region117: #{forward.1} parent=93 // pred_check
                _
              $region118: #{forward.1} parent=93 // pred_check_branch
                %982 = sbr.rel target = $region120
              $region119: #{forward.1} parent=93 // pred_region
                _
              $region120: #{forward.1} parent=93 // pred_fallthru
                _
            $region94: #{forward.1} parent=89 // pred_fallthru
              _
            // Predicated region
            $region95: #{forward.1} parent=89 // pred_check
              _
            $region96: #{forward.1} parent=89 // pred_check_branch
              %953 = sbr.rel target = $region98
            $region97: #{forward.1} parent=89 // pred_region
              loop: start=0, step=1, limit=1
              $region99: #{forward.1} parent=97 // loop_pre_header
                _
              $region100: #{forward.1} parent=97 // loop_header
                %s956 = sphi 0, %s960
                %p957 = scmp.ge.s32.totalorder %s956, 1
                %s961 = sphi %s873, %s873
                %s962 = sphi %s947, %s947
              $region101: #{forward.1} parent=97 // loop_header_branch
                %959 = sbr.rel (%p957) target = $region105
              $region102: #{forward.1} parent=97 // loop_body
                %v963 = vld [vmem:[%s961] sm:$0xff]
                %964 = vst [vmem:[%s962] sm:$0xff] %v963
                %v965 = vld [vmem:[%s961 + $0x8] sm:$0xff]
                %966 = vst [vmem:[%s962 + $0x10] sm:$0xff] %v965
              $region103: #{forward.1} parent=97 // loop_footer
                %s960 = sadd.s32 1, %s956
              $region104: #{forward.1} parent=97 // loop_footer_branch
                %955 = sbr.rel target = $region100
              $region105: #{forward.1} parent=97 // loop_exit
                _
            $region98: #{forward.1} parent=89 // pred_fallthru
              _
          $region90: #{forward.1} parent=85 // pred_fallthru
            _
          %983 = vnop
        $region86: #{forward.1} parent=35 // pred_fallthru
          _
        // Predicated region
        $region121: #{forward.1} parent=35 // pred_check
          %p984 = pneg %p241
        $region122: #{forward.1} parent=35 // pred_check_branch
          %986 = sbr.rel (%p984) target = $region124
        $region123: #{forward.1} parent=35 // pred_region
          %s987 = smul.u32 2, %s24
          %s988 = smul.addr %s23, 8
          %s989 = sadd.s32 %s987, %s988
          %s990 = smul.addr %s989, 4
          %s991 = scalar_lea.vmem %s7, %s990
          // Predicated region
          $region125: #{forward.1} parent=123 // pred_check
            _
          $region126: #{forward.1} parent=123 // pred_check_branch
            %993 = sbr.rel (0) target = $region128
          $region127: #{forward.1} parent=123 // pred_region
            // Predicated region
            $region129: #{forward.1} parent=127 // pred_check
              _
            $region130: #{forward.1} parent=127 // pred_check_branch
              %995 = sbr.rel (0) target = $region132
            $region131: #{forward.1} parent=127 // pred_region
              // Predicated region
              $region144: #{forward.1} parent=131 // pred_check
                _
              $region145: #{forward.1} parent=131 // pred_check_branch
                %1012 = sbr.rel (0) target = $region147
              $region146: #{forward.1} parent=131 // pred_region
                loop: start=0, step=1, limit=1
                $region148: #{forward.1} parent=146 // loop_pre_header
                  _
                $region149: #{forward.1} parent=146 // loop_header
                  %s1014 = sphi 0, %s1018
                  %p1015 = scmp.ge.s32.totalorder %s1014, 1
                  %s1019 = sphi %s877, %s877
                  %s1020 = sphi %s991, %s991
                $region150: #{forward.1} parent=146 // loop_header_branch
                  %1017 = sbr.rel (%p1015) target = $region154
                $region151: #{forward.1} parent=146 // loop_body
                  %v1021 = vld [vmem:[%s1019] sm:$0xff]
                  %1022 = vst [vmem:[%s1020] sm:$0xff] %v1021
                  %v1023 = vld [vmem:[%s1019 + $0x8] sm:$0xff]
                  %1024 = vst [vmem:[%s1020 + $0x10] sm:$0xff] %v1023
                $region152: #{forward.1} parent=146 // loop_footer
                  %s1018 = sadd.s32 1, %s1014
                $region153: #{forward.1} parent=146 // loop_footer_branch
                  %1013 = sbr.rel target = $region149
                $region154: #{forward.1} parent=146 // loop_exit
                  _
              $region147: #{forward.1} parent=131 // pred_fallthru
                _
              // Predicated region
              $region155: #{forward.1} parent=131 // pred_check
                _
              $region156: #{forward.1} parent=131 // pred_check_branch
                %1026 = sbr.rel target = $region158
              $region157: #{forward.1} parent=131 // pred_region
                _
              $region158: #{forward.1} parent=131 // pred_fallthru
                _
            $region132: #{forward.1} parent=127 // pred_fallthru
              _
            // Predicated region
            $region133: #{forward.1} parent=127 // pred_check
              _
            $region134: #{forward.1} parent=127 // pred_check_branch
              %997 = sbr.rel target = $region136
            $region135: #{forward.1} parent=127 // pred_region
              loop: start=0, step=1, limit=1
              $region137: #{forward.1} parent=135 // loop_pre_header
                _
              $region138: #{forward.1} parent=135 // loop_header
                %s1000 = sphi 0, %s1004
                %p1001 = scmp.ge.s32.totalorder %s1000, 1
                %s1005 = sphi %s877, %s877
                %s1006 = sphi %s991, %s991
              $region139: #{forward.1} parent=135 // loop_header_branch
                %1003 = sbr.rel (%p1001) target = $region143
              $region140: #{forward.1} parent=135 // loop_body
                %v1007 = vld [vmem:[%s1005] sm:$0xff]
                %1008 = vst [vmem:[%s1006] sm:$0xff] %v1007
                %v1009 = vld [vmem:[%s1005 + $0x8] sm:$0xff]
                %1010 = vst [vmem:[%s1006 + $0x10] sm:$0xff] %v1009
              $region141: #{forward.1} parent=135 // loop_footer
                %s1004 = sadd.s32 1, %s1000
              $region142: #{forward.1} parent=135 // loop_footer_branch
                %999 = sbr.rel target = $region138
              $region143: #{forward.1} parent=135 // loop_exit
                _
            $region136: #{forward.1} parent=127 // pred_fallthru
              _
          $region128: #{forward.1} parent=123 // pred_fallthru
            _
          %1027 = vnop
        $region124: #{forward.1} parent=35 // pred_fallthru
          _
      $region36: #{forward.1} parent=5 // pred_fallthru
        _
      %p1028 = scmp.le.s32.totalorder 2, %s14
      // Predicated region
      $region159: #{forward.1} parent=5 // pred_check
        %p1029 = pneg %p1028
      $region160: #{forward.1} parent=5 // pred_check_branch
        %1031 = sbr.rel (%p1029) target = $region162
      $region161: #{forward.1} parent=5 // pred_region
        %s1032 = ssub.s32 %s14, 2
        // Predicated region
        $region163: #{forward.1} parent=161 // pred_check
          %p1033 = pneg %p163
        $region164: #{forward.1} parent=161 // pred_check_branch
          %1035 = sbr.rel (%p1033) target = $region166
        $region165: #{forward.1} parent=161 // pred_region
          %s1036 = sand.u32 %s148, 1
          %s1037 = sand.u32 %s148, 1
          %s1038 = smul.addr %s1037, 32
          %s1039 = scalar_lea.vmem [#allocation2], %s1038
        $region166: #{forward.1} parent=161 // pred_fallthru
          _
        // Predicated region
        $region167: #{forward.1} parent=161 // pred_check
          %p1040 = pneg %p191
        $region168: #{forward.1} parent=161 // pred_check_branch
          %1042 = sbr.rel (%p1040) target = $region170
        $region169: #{forward.1} parent=161 // pred_region
          %s1043 = sand.u32 %s176, 1
          %s1044 = sand.u32 %s176, 1
          %s1045 = smul.addr %s1044, 32
          %s1046 = scalar_lea.vmem [#allocation3], %s1045
        $region170: #{forward.1} parent=161 // pred_fallthru
          _
        // Predicated region
        $region171: #{forward.1} parent=161 // pred_check
          %p1047 = pneg %p219
        $region172: #{forward.1} parent=161 // pred_check_branch
          %1049 = sbr.rel (%p1047) target = $region174
        $region173: #{forward.1} parent=161 // pred_region
          %s1050 = sand.u32 %s204, 1
          %s1051 = sand.u32 %s204, 1
          %s1052 = smul.addr %s1051, 16
          %s1053 = scalar_lea.vmem [#allocation4], %s1052
        $region174: #{forward.1} parent=161 // pred_fallthru
          _
        // Predicated region
        $region175: #{forward.1} parent=161 // pred_check
          %p1054 = pneg %p247
        $region176: #{forward.1} parent=161 // pred_check_branch
          %1056 = sbr.rel (%p1054) target = $region178
        $region177: #{forward.1} parent=161 // pred_region
          %s1057 = sand.u32 %s232, 1
          %s1058 = sand.u32 %s232, 1
          %s1059 = smul.addr %s1058, 16
          %s1060 = scalar_lea.vmem [#allocation5], %s1059
        $region178: #{forward.1} parent=161 // pred_fallthru
          _
      $region162: #{forward.1} parent=5 // pred_fallthru
        _
    $region6: #{forward.1} parent=1 // loop_footer
      %s18 = sadd.s32 1, %s14
    $region7: #{forward.1} parent=1 // loop_footer_branch
      %13 = sbr.rel target = $region3
    $region8: #{forward.1} parent=1 // loop_exit
      _

</llo_original>
